<compile_context>
chip_gen: v6e
topology: v6e:2x2x1
jax: 0.10.0
libtpu: 0.0.40
codegen_flags: <defaults>
</compile_context>

<pallas_src>
import functools

import jax
import jax.numpy as jnp
from jax.experimental import pallas as pl
from jax.experimental.pallas import tpu as pltpu

EPS = 1e-5
LANE = 128


# ------------------------------ helpers ------------------------------------ #

def _round_up(x, m):
    return (x + m - 1) // m * m


def _vmem_cap_bytes():
    try:
        cap = int(pltpu.get_tpu_info().vmem_capacity_bytes)
        if cap > 0:
            return cap
    except Exception:
        pass
    return 64 * 1024 * 1024  # conservative fallback (v7x per-TC)


def _vmem_limit(per_step_bytes):
    cap = _vmem_cap_bytes()
    want = int(per_step_bytes) * 3 + (16 << 20)   # x2 buffering + intermediates
    return int(min(max(want, 32 << 20), int(cap * 0.85)))


def _pick_bm(m, vmem_cap):
    """128-aligned row tile; bigger on 128 MiB single-TC chips, >=2 steps if possible."""
    big = 1024 if vmem_cap >= (100 << 20) else 512
    if m <= 128:
        return max(8, _round_up(m, 8))
    if m <= 256:
        return 128
    return min(big, _round_up((m + 1) // 2, 128))


def _pick_row_tile(Ho, Wo, N):
    """Output-row tile for the fused conv kernel: 8-aligned flattened rows,
    decent MXU M per step, >= 4 total grid steps when the problem allows."""
    divs = [d for d in range(1, Ho + 1) if Ho % d == 0]
    ok = [d for d in divs if d == Ho or (d * Wo) % 8 == 0]
    good = [d for d in ok if d * Wo >= 128] or ok
    min_tiles = -(-4 // max(1, N))                  # ceil(4 / N)
    limit = Ho // min_tiles if min_tiles <= Ho else 0
    cands = [d for d in good if d <= limit]
    return max(cands) if cands else min(good)


# -------------------- fused (BN+ReLU) -> 1x1 matmul -> (BN+ReLU) ------------ #

def fused_matmul(a, w, *, pre=None, post=None, out_dtype=jnp.float32):
    """o = [relu(a*pre_s + pre_b)] @ w ; optionally o = relu(o*post_s + post_b).

    a: (M, K) bf16, w: (K, N) bf16, pre/post: None or ((1,K)/(1,N) f32 scale, shift).
    BN math in f32, MXU in bf16, f32 accumulation."""
    M, K = a.shape
    Kw, Nc = w.shape
    assert K == Kw
    has_pre, has_post = pre is not None, post is not None

    cap = _vmem_cap_bytes()
    bm = _pick_bm(M, cap)
    m_pad = _round_up(M, bm)
    if m_pad != M:
        a = jnp.pad(a, ((0, m_pad - M), (0, 0)))   # padded rows discarded below

    def kernel(*refs):
        i = 0
        a_ref = refs[i]; i += 1
        if has_pre:
            ps_ref, pb_ref = refs[i], refs[i + 1]; i += 2
        w_ref = refs[i]; i += 1
        if has_post:
            qs_ref, qb_ref = refs[i], refs[i + 1]; i += 2
        o_ref = refs[i]

        x = a_ref[...]
        if has_pre:   # fused BN+ReLU prologue (VPU work, hides under the MXU)
            x = jnp.maximum(x.astype(jnp.float32) * ps_ref[...] + pb_ref[...], 0.0)
        acc = jnp.dot(x.astype(jnp.bfloat16), w_ref[...],
                      preferred_element_type=jnp.float32)
        if has_post:  # fused BN+ReLU epilogue
            acc = jnp.maximum(acc * qs_ref[...] + qb_ref[...], 0.0)
        o_ref[...] = acc.astype(o_ref.dtype)

    operands = [a]
    in_specs = [pl.BlockSpec((bm, K), lambda i: (i, 0))]
    if has_pre:
        operands += [pre[0], pre[1]]
        in_specs += [pl.BlockSpec((1, K), lambda i: (0, 0))] * 2
    operands.append(w)
    # Constant index_map: weight block index never changes -> fetched once.
    # TODO(synk): single-buffer the invariant weight (pipeline_mode) to save VMEM on v7x.
    in_specs.append(pl.BlockSpec((K, Nc), lambda i: (0, 0)))
    if has_post:
        operands += [post[0], post[1]]
        in_specs += [pl.BlockSpec((1, Nc), lambda i: (0, 0))] * 2

    out_isz = jnp.dtype(out_dtype).itemsize
    block_bytes = bm * K * 2 + K * Nc * 2 + bm * Nc * out_isz + bm * (K + Nc) * 4
    bytes_accessed = m_pad * K * 2 + K * Nc * 2 + m_pad * Nc * out_isz

    out = pl.pallas_call(
        kernel,
        out_shape=jax.ShapeDtypeStruct((m_pad, Nc), out_dtype),
        grid=(m_pad // bm,),
        in_specs=in_specs,
        out_specs=pl.BlockSpec((bm, Nc), lambda i: (i, 0)),
        compiler_params=pltpu.CompilerParams(
            dimension_semantics=("parallel",),
            vmem_limit_bytes=_vmem_limit(block_bytes)),
        cost_estimate=pl.CostEstimate(flops=2 * m_pad * K * Nc, transcendentals=0,
                                      bytes_accessed=int(bytes_accessed)),
    )(*operands)
    return out[:M] if m_pad != M else out


# ------ fused 3x3 conv (single im2col matmul) + BN3/ReLU + conv3 + shortcut -- #

def _block2_kernel(*refs, stride, th, Wo, planes_p, has_proj, has_bn1):
    """Per (image, output-row-tile): 3x3 conv as ONE matmul over an in-VMEM
    im2col slab, fused bn3+ReLU, 1x1 conv3, fused shortcut branch, residual add."""
    i = 0
    ph_ref = refs[i]; i += 1            # (1, P, Hph, Wph, Cp) bf16 (full image)
    w2_ref = refs[i]; i += 1            # (9*Cp, Cp) bf16
    s3_ref, b3_ref = refs[i], refs[i + 1]; i += 2
    w3_ref = refs[i]; i += 1            # (Cp, Op) bf16
    xs_ref = refs[i]; i += 1            # (1, th*Wo, Cin_p) shortcut operand
    if has_proj:
        if has_bn1:
            s1_ref, b1_ref = refs[i], refs[i + 1]; i += 2
        wsc_ref = refs[i]; i += 1
    o_ref = refs[i]

    q = 2 // stride
    r0 = pl.multiple_of(pl.program_id(1) * th, th)

    # Build the im2col slab (th*Wo, 9*Cp) from the stride-phase windows; one
    # big-K MXU matmul instead of 9 small dots + VPU adds.
    win = {}
    cols = []
    for kh in range(3):
        for kw in range(3):
            p = (kh % stride) * stride + (kw % stride)
            oh, ow = kh // stride, kw // stride
            if p not in win:
                win[p] = ph_ref[0, p, pl.ds(r0, th + q), :, :]   # (th+q, Wph, Cp)
            tap = win[p][oh:oh + th, ow:ow + Wo, :]               # (th, Wo, Cp)
            cols.append(tap.reshape(th * Wo, planes_p))
    slab = jnp.concatenate(cols, axis=-1)                         # (th*Wo, 9*Cp)

    h = jnp.dot(slab, w2_ref[...], preferred_element_type=jnp.float32)
    h = jnp.maximum(h * s3_ref[...] + b3_ref[...], 0.0).astype(jnp.bfloat16)
    out = jnp.dot(h, w3_ref[...], preferred_element_type=jnp.float32)

    xs = xs_ref[0]
    if has_proj:
        z = xs.astype(jnp.float32)
        if has_bn1:
            z = jnp.maximum(z * s1_ref[...] + b1_ref[...], 0.0)
        res = jnp.dot(z.astype(jnp.bfloat16), wsc_ref[...],
                      preferred_element_type=jnp.float32)
    else:
        res = xs.astype(jnp.float32)        # identity skip kept f32
    o_ref[0] = out + res


def conv2_bn_conv3_shortcut(pre2, w2, s3, b3, w3, xs, bn1, wsc, *, stride, Ho, Wo):
    """pre2: (N, H, W, Cp) bf16 (bn2+relu'd conv2 input).  Returns
    (N, Ho*Wo, Op) f32 = conv3(relu(bn3(conv2(pre2)))) + shortcut."""
    N, H, W, pp = pre2.shape
    outc_p = w3.shape[1]
    cin_p = xs.shape[-1]
    q = 2 // stride
    Hph, Wph = Ho + q, Wo + q
    P = stride * stride

    # Zero-pad (padding=1) plus alignment extras so every stride-phase slice has
    # a uniform (Hph, Wph) shape.
    need_h = (stride - 1) + stride * (Hph - 1) + 1
    need_w = (stride - 1) + stride * (Wph - 1) + 1
    padded = jnp.pad(pre2,
                     ((0, 0),
                      (1, 1 + max(0, need_h - (H + 2))),
                      (1, 1 + max(0, need_w - (W + 2))),
                      (0, 0)))
    if stride == 1:
        phases = padded[:, None]            # no stack, no extra data movement
    else:
        # TODO(synk): move the stride-phase extraction in-kernel (strided DMA)
        # so pre2 is read from HBM exactly once for stride > 1.
        phases = jnp.stack(
            [padded[:, a::stride, b::stride, :][:, :Hph, :Wph, :]
             for a in range(stride) for b in range(stride)],
            axis=1)                          # (N, P, Hph, Wph, Cp)

    th = _pick_row_tile(Ho, Wo, N)
    n_t = Ho // th
    has_proj = wsc is not None
    has_bn1 = bn1 is not None

    kern = functools.partial(_block2_kernel, stride=stride, th=th, Wo=Wo,
                             planes_p=pp, has_proj=has_proj, has_bn1=has_bn1)

    operands = [phases, w2, s3, b3, w3, xs]
    in_specs = [
        # Full-image phase block per n; constant across the row-tile axis so it
        # is DMA'd once per image and stays resident.
        pl.BlockSpec((1, P, Hph, Wph, pp), lambda n, t: (n, 0, 0, 0, 0)),
        pl.BlockSpec((9 * pp, pp), lambda n, t: (0, 0)),
        pl.BlockSpec((1, pp), lambda n, t: (0, 0)),
        pl.BlockSpec((1, pp), lambda n, t: (0, 0)),
        pl.BlockSpec((pp, outc_p), lambda n, t: (0, 0)),
        pl.BlockSpec((1, th * Wo, cin_p), lambda n, t: (n, t, 0)),
    ]
    if has_proj:
        if has_bn1:
            operands += [bn1[0], bn1[1]]
            in_specs += [pl.BlockSpec((1, cin_p), lambda n, t: (0, 0))] * 2
        operands.append(wsc)
        in_specs.append(pl.BlockSpec((cin_p, outc_p), lambda n, t: (0, 0)))

    xs_isz = xs.dtype.itemsize
    block_bytes = (P * Hph * Wph * pp * 2 + 9 * pp * pp * 2 + pp * outc_p * 2
                   + th * Wo * cin_p * xs_isz
                   + (cin_p * outc_p * 2 if has_proj else 0)
                   + th * Wo * outc_p * 4
                   + th * Wo * 9 * pp * 2         # im2col slab
                   + th * Wo * (pp + outc_p) * 4)  # f32 intermediates
    flops = 2 * N * Ho * Wo * pp * (9 * pp + outc_p)
    if has_proj:
        flops += 2 * N * Ho * Wo * cin_p * outc_p
    bytes_accessed = (int(phases.size) * 2 + int(w2.size) * 2 + int(w3.size) * 2
                      + int(xs.size) * xs_isz + N * Ho * Wo * outc_p * 4)

    return pl.pallas_call(
        kern,
        out_shape=jax.ShapeDtypeStruct((N, Ho * Wo, outc_p), jnp.float32),
        grid=(N, n_t),
        in_specs=in_specs,
        out_specs=pl.BlockSpec((1, th * Wo, outc_p), lambda n, t: (n, t, 0)),
        compiler_params=pltpu.CompilerParams(
            dimension_semantics=("parallel", "parallel"),
            vmem_limit_bytes=_vmem_limit(block_bytes)),
        cost_estimate=pl.CostEstimate(flops=int(flops), transcendentals=0,
                                      bytes_accessed=int(bytes_accessed)),
    )(*operands)


# ----------------------------- Forward (glue) ------------------------------ #

def preact_bottleneck_forward(x_nchw, params, *, stride=1, first=False):
    """Pallas implementation of PreActBottleneck.forward.  x_nchw: (N, Cin, H, W)."""
    N, Cin, H, W = x_nchw.shape
    planes = params["conv1_w"].shape[0]
    out_c = params["conv3_w"].shape[0]              # 4 * planes
    cin_p = _round_up(Cin, LANE)
    pp = _round_up(planes, LANE)
    outc_p = _round_up(out_c, LANE)

    Ho = (H - 1) // stride + 1
    Wo = (W - 1) // stride + 1

    # NHWC, channels zero-padded to lane-dense multiples of 128; bf16 activations.
    x = jnp.transpose(x_nchw, (0, 2, 3, 1)).astype(jnp.float32)
    x = jnp.pad(x, ((0, 0), (0, 0), (0, 0), (0, cin_p - Cin)))
    x_bf = x.astype(jnp.bfloat16)
    x2d = x_bf.reshape(-1, cin_p)

    # Folded (eval-mode) BN params, zero-padded so padded channels stay exactly 0.
    def fold(bn, cpad):
        g, b, m, v = bn
        s = g / jnp.sqrt(v + EPS)
        sh = b - m * s
        s = jnp.pad(s, (0, cpad - s.shape[0])).astype(jnp.float32)[None, :]
        sh = jnp.pad(sh, (0, cpad - sh.shape[0])).astype(jnp.float32)[None, :]
        return s, sh

    bn1 = fold(params["bn1"], cin_p) if not first else None
    s2, b2 = fold(params["bn2"], pp)
    s3, b3 = fold(params["bn3"], pp)

    def pad2(w2d, rows, cols):
        return jnp.pad(w2d, ((0, rows - w2d.shape[0]), (0, cols - w2d.shape[1])))

    w1 = pad2(params["conv1_w"][:, :, 0, 0].T, cin_p, pp).astype(jnp.bfloat16)
    w3 = pad2(params["conv3_w"][:, :, 0, 0].T, pp, outc_p).astype(jnp.bfloat16)
    w2 = jnp.transpose(params["conv2_w"], (2, 3, 1, 0))            # (3,3,I,O)
    w2 = jnp.pad(w2, ((0, 0), (0, 0), (0, pp - planes), (0, pp - planes)))
    w2 = w2.reshape(9 * pp, pp).astype(jnp.bfloat16)               # tap-major K

    # conv1 (1x1) with fused bn1+ReLU prologue and bn2+ReLU epilogue -> bf16.
    pre2 = fused_matmul(x2d, w1, pre=bn1, post=(s2, b2), out_dtype=jnp.bfloat16)
    pre2 = pre2.reshape(N, H, W, pp)

    # Shortcut operand — fused into the second kernel (no residual HBM round trip).
    has_proj = "sc_w" in params
    if has_proj:
        xs = x_bf[:, ::stride, ::stride, :].reshape(N, Ho * Wo, cin_p)
        wsc = pad2(params["sc_w"][:, :, 0, 0].T, cin_p, outc_p).astype(jnp.bfloat16)
    else:
        assert stride == 1 and Cin == out_c, "identity shortcut requires matching shapes"
        xs = x[:, ::stride, ::stride, :].reshape(N, Ho * Wo, cin_p)   # f32 skip
        wsc = None

    # conv2 (3x3) + bn3+ReLU + conv3 (1x1) + shortcut + residual add: one kernel.
    out = conv2_bn_conv3_shortcut(pre2, w2, s3, b3, w3, xs,
                                  bn1 if has_proj else None, wsc,
                                  stride=stride, Ho=Ho, Wo=Wo)

    out = out.reshape(N, Ho, Wo, outc_p)[..., :out_c]
    return jnp.transpose(out, (0, 3, 1, 2))          # back to NCHW


# ------------------------------ pure-JAX reference ------------------------- #

def reference_forward(x, params, *, stride=1, first=False):
    def bn(y, g, b, m, v):
        return (y - m[None, :, None, None]) / jnp.sqrt(v + EPS)[None, :, None, None] * g[
            None, :, None, None
        ] + b[None, :, None, None]

    def conv(y, w, s=1, p=0):
        return jax.lax.conv_general_dilated(
            y, w, (s, s), ((p, p), (p, p)), dimension_numbers=("NCHW", "OIHW", "NCHW")
        )

    out = jax.nn.relu(bn(x, *params["bn1"])) if not first else x
    sc = conv(out, params["sc_w"], s=stride) if "sc_w" in params else x
    out = conv(out, params["conv1_w"])
    out = conv(jax.nn.relu(bn(out, *params["bn2"])), params["conv2_w"], s=stride, p=1)
    out = conv(jax.nn.relu(bn(out, *params["bn3"])), params["conv3_w"])
    return out + sc


# ----------------------------------- main ----------------------------------- #

def make_params(key, in_planes, planes, stride):
    expansion = 4
    ks = jax.random.split(key, 16)

    def bn_params(k, c):
        k1, k2, k3, k4 = jax.random.split(k, 4)
        gamma = jax.random.uniform(k1, (c,), minval=0.5, maxval=1.5)
        beta = 0.1 * jax.random.normal(k2, (c,))
        mean = 0.1 * jax.random.normal(k3, (c,))
        var = jax.random.uniform(k4, (c,), minval=0.5, maxval=1.5)
        return (gamma, beta, mean, var)

    params = {
        "bn1": bn_params(ks[0], in_planes),
        "conv1_w": 0.1 * jax.random.normal(ks[1], (planes, in_planes, 1, 1)),
        "bn2": bn_params(ks[2], planes),
        "conv2_w": 0.1 * jax.random.normal(ks[3], (planes, planes, 3, 3)),
        "bn3": bn_params(ks[4], planes),
        "conv3_w": 0.1 * jax.random.normal(ks[5], (expansion * planes, planes, 1, 1)),
    }
    if stride != 1 or in_planes != expansion * planes:
        params["sc_w"] = 0.1 * jax.random.normal(
            ks[6], (expansion * planes, in_planes, 1, 1)
        )
    return params


if __name__ == "__main__":
    key = jax.random.PRNGKey(0)
    kx, kp = jax.random.split(key)

    N, in_planes, planes, H, W, stride = 2, 4, 4, 16, 16, 2
    x = jax.random.normal(kx, (N, in_planes, H, W), dtype=jnp.float32)
    params = make_params(kp, in_planes, planes, stride)

    fwd = jax.jit(functools.partial(preact_bottleneck_forward, stride=stride, first=False))
    out = jax.block_until_ready(fwd(x, params))

    ref = reference_forward(x, params, stride=stride, first=False)
    assert out.shape == ref.shape == (N, 4 * planes, 8, 8), (out.shape, ref.shape)
    # bf16 MXU operands + bf16 intermediate/shortcut activations (f32 accumulation)
    # -> loosened tolerance vs the f32 reference.
    max_err = float(jnp.max(jnp.abs(out - ref)))
    assert jnp.allclose(out, ref, atol=7e-2, rtol=7e-2), max_err

    print("KERNEL_OK")
</pallas_src>

<mosaic_0001>
module attributes {stable_mosaic.version = 11 : i64} {
  func.func @kernel(%arg0: i32, %arg1: memref<256x128xbf16, #tpu.memory_space<vmem>>, %arg2: memref<1x128xf32, #tpu.memory_space<vmem>>, %arg3: memref<1x128xf32, #tpu.memory_space<vmem>>, %arg4: memref<128x128xbf16, #tpu.memory_space<vmem>>, %arg5: memref<1x128xf32, #tpu.memory_space<vmem>>, %arg6: memref<1x128xf32, #tpu.memory_space<vmem>>, %arg7: memref<256x128xbf16, #tpu.memory_space<vmem>>) attributes {dimension_semantics = [#tpu.dimension_semantics<parallel>], iteration_bounds = array<i64: 2>, scalar_prefetch = 0 : i64, scratch_operands = 0 : i64, tpu.core_type = #tpu.core_type<tc>, window_params = [{transform_indices = @transform_0, window_bounds = array<i64: 256, 128>}, {pipeline_mode = #tpu.pipeline_mode<synchronous>, transform_indices = @transform_1, window_bounds = array<i64: 1, 128>}, {pipeline_mode = #tpu.pipeline_mode<synchronous>, transform_indices = @transform_2, window_bounds = array<i64: 1, 128>}, {pipeline_mode = #tpu.pipeline_mode<synchronous>, transform_indices = @transform_3, window_bounds = array<i64: 128, 128>}, {pipeline_mode = #tpu.pipeline_mode<synchronous>, transform_indices = @transform_4, window_bounds = array<i64: 1, 128>}, {pipeline_mode = #tpu.pipeline_mode<synchronous>, transform_indices = @transform_5, window_bounds = array<i64: 1, 128>}, {transform_indices = @transform_6, window_bounds = array<i64: 256, 128>}]} {
    %c0 = arith.constant 0 : index
    %c0_0 = arith.constant 0 : index
    %0 = vector.load %arg1[%c0, %c0_0] : memref<256x128xbf16, #tpu.memory_space<vmem>>, vector<256x128xbf16>
    %1 = arith.extf %0 : vector<256x128xbf16> to vector<256x128xf32>
    %c0_1 = arith.constant 0 : index
    %c0_2 = arith.constant 0 : index
    %2 = vector.load %arg2[%c0_1, %c0_2] : memref<1x128xf32, #tpu.memory_space<vmem>>, vector<1x128xf32>
    %3 = vector.broadcast %2 : vector<1x128xf32> to vector<256x128xf32>
    %4 = arith.mulf %1, %3 : vector<256x128xf32>
    %c0_3 = arith.constant 0 : index
    %c0_4 = arith.constant 0 : index
    %5 = vector.load %arg3[%c0_3, %c0_4] : memref<1x128xf32, #tpu.memory_space<vmem>>, vector<1x128xf32>
    %6 = vector.broadcast %5 : vector<1x128xf32> to vector<256x128xf32>
    %7 = arith.addf %4, %6 : vector<256x128xf32>
    %cst = arith.constant 0.000000e+00 : f32
    %8 = vector.broadcast %cst : f32 to vector<256x128xf32>
    %9 = arith.maximumf %7, %8 : vector<256x128xf32>
    %10 = arith.truncf %9 : vector<256x128xf32> to vector<256x128xbf16>
    %c0_5 = arith.constant 0 : index
    %c0_6 = arith.constant 0 : index
    %11 = vector.load %arg4[%c0_5, %c0_6] : memref<128x128xbf16, #tpu.memory_space<vmem>>, vector<128x128xbf16>
    %cst_7 = arith.constant dense<0.000000e+00> : vector<256x128xf32>
    %12 = tpu.matmul %10, %11, %cst_7 {dimension_numbers = #tpu.dot_dimension_numbers<[1], [0], [0], [1], [0, 0, 1, 1], [], []>} : vector<256x128xbf16>, vector<128x128xbf16>, vector<256x128xf32> -> vector<256x128xf32>
    %c0_8 = arith.constant 0 : index
    %c0_9 = arith.constant 0 : index
    %13 = vector.load %arg5[%c0_8, %c0_9] : memref<1x128xf32, #tpu.memory_space<vmem>>, vector<1x128xf32>
    %14 = vector.broadcast %13 : vector<1x128xf32> to vector<256x128xf32>
    %15 = arith.mulf %12, %14 : vector<256x128xf32>
    %c0_10 = arith.constant 0 : index
    %c0_11 = arith.constant 0 : index
    %16 = vector.load %arg6[%c0_10, %c0_11] : memref<1x128xf32, #tpu.memory_space<vmem>>, vector<1x128xf32>
    %17 = vector.broadcast %16 : vector<1x128xf32> to vector<256x128xf32>
    %18 = arith.addf %15, %17 : vector<256x128xf32>
    %cst_12 = arith.constant 0.000000e+00 : f32
    %19 = vector.broadcast %cst_12 : f32 to vector<256x128xf32>
    %20 = arith.maximumf %18, %19 : vector<256x128xf32>
    %21 = arith.truncf %20 : vector<256x128xf32> to vector<256x128xbf16>
    %c0_13 = arith.constant 0 : index
    %c0_14 = arith.constant 0 : index
    %22 = vector.load %arg7[%c0_13, %c0_14] : memref<256x128xbf16, #tpu.memory_space<vmem>>, vector<256x128xbf16>
    tpu.vector_store %arg7[%c0_13, %c0_14], %21 {strides = array<i32>} : memref<256x128xbf16, #tpu.memory_space<vmem>>, vector<256x128xbf16>,
    return
  }
  func.func @transform_0(%arg0: i32) -> (i32, i32) {
    %c0_i32 = arith.constant 0 : i32
    %c0_i32_0 = arith.constant 0 : i32
    return %arg0, %c0_i32 : i32, i32
  }
  func.func @transform_1(%arg0: i32) -> (i32, i32) {
    %c0_i32 = arith.constant 0 : i32
    %c0_i32_0 = arith.constant 0 : i32
    %c0_i32_1 = arith.constant 0 : i32
    return %c0_i32, %c0_i32_0 : i32, i32
  }
  func.func @transform_2(%arg0: i32) -> (i32, i32) {
    %c0_i32 = arith.constant 0 : i32
    %c0_i32_0 = arith.constant 0 : i32
    %c0_i32_1 = arith.constant 0 : i32
    return %c0_i32, %c0_i32_0 : i32, i32
  }
  func.func @transform_3(%arg0: i32) -> (i32, i32) {
    %c0_i32 = arith.constant 0 : i32
    %c0_i32_0 = arith.constant 0 : i32
    %c0_i32_1 = arith.constant 0 : i32
    return %c0_i32, %c0_i32_0 : i32, i32
  }
  func.func @transform_4(%arg0: i32) -> (i32, i32) {
    %c0_i32 = arith.constant 0 : i32
    %c0_i32_0 = arith.constant 0 : i32
    %c0_i32_1 = arith.constant 0 : i32
    return %c0_i32, %c0_i32_0 : i32, i32
  }
  func.func @transform_5(%arg0: i32) -> (i32, i32) {
    %c0_i32 = arith.constant 0 : i32
    %c0_i32_0 = arith.constant 0 : i32
    %c0_i32_1 = arith.constant 0 : i32
    return %c0_i32, %c0_i32_0 : i32, i32
  }
  func.func @transform_6(%arg0: i32) -> (i32, i32) {
    %c0_i32 = arith.constant 0 : i32
    %c0_i32_0 = arith.constant 0 : i32
    return %arg0, %c0_i32 : i32, i32
  }
}

module attributes {stable_mosaic.version = 11 : i64} {
  func.func @_block2_kernel(%arg0: i32, %arg1: i32, %arg2: memref<1x4x9x9x128xbf16, #tpu.memory_space<vmem>>, %arg3: memref<1152x128xbf16, #tpu.memory_space<vmem>>, %arg4: memref<1x128xf32, #tpu.memory_space<vmem>>, %arg5: memref<1x128xf32, #tpu.memory_space<vmem>>, %arg6: memref<128x128xbf16, #tpu.memory_space<vmem>>, %arg7: memref<1x32x128xbf16, #tpu.memory_space<vmem>>, %arg8: memref<1x128xf32, #tpu.memory_space<vmem>>, %arg9: memref<1x128xf32, #tpu.memory_space<vmem>>, %arg10: memref<128x128xbf16, #tpu.memory_space<vmem>>, %arg11: memref<1x32x128xf32, #tpu.memory_space<vmem>>) attributes {dimension_semantics = [#tpu.dimension_semantics<parallel>, #tpu.dimension_semantics<parallel>], iteration_bounds = array<i64: 2, 2>, scalar_prefetch = 0 : i64, scratch_operands = 0 : i64, tpu.core_type = #tpu.core_type<tc>, window_params = [{transform_indices = @transform_0, window_bounds = array<i64: 1, 4, 9, 9, 128>}, {pipeline_mode = #tpu.pipeline_mode<synchronous>, transform_indices = @transform_1, window_bounds = array<i64: 1152, 128>}, {pipeline_mode = #tpu.pipeline_mode<synchronous>, transform_indices = @transform_2, window_bounds = array<i64: 1, 128>}, {pipeline_mode = #tpu.pipeline_mode<synchronous>, transform_indices = @transform_3, window_bounds = array<i64: 1, 128>}, {pipeline_mode = #tpu.pipeline_mode<synchronous>, transform_indices = @transform_4, window_bounds = array<i64: 128, 128>}, {transform_indices = @transform_5, window_bounds = array<i64: 1, 32, 128>}, {pipeline_mode = #tpu.pipeline_mode<synchronous>, transform_indices = @transform_6, window_bounds = array<i64: 1, 128>}, {pipeline_mode = #tpu.pipeline_mode<synchronous>, transform_indices = @transform_7, window_bounds = array<i64: 1, 128>}, {pipeline_mode = #tpu.pipeline_mode<synchronous>, transform_indices = @transform_8, window_bounds = array<i64: 128, 128>}, {transform_indices = @transform_9, window_bounds = array<i64: 1, 32, 128>}]} {
    %c4_i32 = arith.constant 4 : i32
    %0 = arith.muli %arg1, %c4_i32 : i32
    %1 = tpu.assume_multiple %0, 4 : i32
    %c0 = arith.constant 0 : index
    %c0_0 = arith.constant 0 : index
    %2 = arith.index_cast %1 : i32 to index
    %c0_1 = arith.constant 0 : index
    %c0_2 = arith.constant 0 : index
    %3 = vector.load %arg2[%c0, %c0_0, %2, %c0_1, %c0_2] : memref<1x4x9x9x128xbf16, #tpu.memory_space<vmem>>, vector<1x1x5x9x128xbf16>
    %4 = vector.shape_cast %3 : vector<1x1x5x9x128xbf16> to vector<5x9x128xbf16>
    %5 = vector.extract_strided_slice %4 {offsets = [0, 0, 0], sizes = [4, 8, 128], strides = [1, 1, 1]} : vector<5x9x128xbf16> to vector<4x8x128xbf16>
    %6 = vector.shape_cast %5 : vector<4x8x128xbf16> to vector<32x128xbf16>
    %c0_3 = arith.constant 0 : index
    %c1 = arith.constant 1 : index
    %7 = arith.index_cast %1 : i32 to index
    %c0_4 = arith.constant 0 : index
    %c0_5 = arith.constant 0 : index
    %8 = vector.load %arg2[%c0_3, %c1, %7, %c0_4, %c0_5] : memref<1x4x9x9x128xbf16, #tpu.memory_space<vmem>>, vector<1x1x5x9x128xbf16>
    %9 = vector.shape_cast %8 : vector<1x1x5x9x128xbf16> to vector<5x9x128xbf16>
    %10 = vector.extract_strided_slice %9 {offsets = [0, 0, 0], sizes = [4, 8, 128], strides = [1, 1, 1]} : vector<5x9x128xbf16> to vector<4x8x128xbf16>
    %11 = vector.shape_cast %10 : vector<4x8x128xbf16> to vector<32x128xbf16>
    %12 = vector.extract_strided_slice %4 {offsets = [0, 1, 0], sizes = [4, 8, 128], strides = [1, 1, 1]} : vector<5x9x128xbf16> to vector<4x8x128xbf16>
    %13 = vector.shape_cast %12 : vector<4x8x128xbf16> to vector<32x128xbf16>
    %c0_6 = arith.constant 0 : index
    %c2 = arith.constant 2 : index
    %14 = arith.index_cast %1 : i32 to index
    %c0_7 = arith.constant 0 : index
    %c0_8 = arith.constant 0 : index
    %15 = vector.load %arg2[%c0_6, %c2, %14, %c0_7, %c0_8] : memref<1x4x9x9x128xbf16, #tpu.memory_space<vmem>>, vector<1x1x5x9x128xbf16>
    %16 = vector.shape_cast %15 : vector<1x1x5x9x128xbf16> to vector<5x9x128xbf16>
    %17 = vector.extract_strided_slice %16 {offsets = [0, 0, 0], sizes = [4, 8, 128], strides = [1, 1, 1]} : vector<5x9x128xbf16> to vector<4x8x128xbf16>
    %18 = vector.shape_cast %17 : vector<4x8x128xbf16> to vector<32x128xbf16>
    %c0_9 = arith.constant 0 : index
    %c3 = arith.constant 3 : index
    %19 = arith.index_cast %1 : i32 to index
    %c0_10 = arith.constant 0 : index
    %c0_11 = arith.constant 0 : index
    %20 = vector.load %arg2[%c0_9, %c3, %19, %c0_10, %c0_11] : memref<1x4x9x9x128xbf16, #tpu.memory_space<vmem>>, vector<1x1x5x9x128xbf16>
    %21 = vector.shape_cast %20 : vector<1x1x5x9x128xbf16> to vector<5x9x128xbf16>
    %22 = vector.extract_strided_slice %21 {offsets = [0, 0, 0], sizes = [4, 8, 128], strides = [1, 1, 1]} : vector<5x9x128xbf16> to vector<4x8x128xbf16>
    %23 = vector.shape_cast %22 : vector<4x8x128xbf16> to vector<32x128xbf16>
    %24 = vector.extract_strided_slice %16 {offsets = [0, 1, 0], sizes = [4, 8, 128], strides = [1, 1, 1]} : vector<5x9x128xbf16> to vector<4x8x128xbf16>
    %25 = vector.shape_cast %24 : vector<4x8x128xbf16> to vector<32x128xbf16>
    %26 = vector.extract_strided_slice %4 {offsets = [1, 0, 0], sizes = [4, 8, 128], strides = [1, 1, 1]} : vector<5x9x128xbf16> to vector<4x8x128xbf16>
    %27 = vector.shape_cast %26 : vector<4x8x128xbf16> to vector<32x128xbf16>
    %28 = vector.extract_strided_slice %9 {offsets = [1, 0, 0], sizes = [4, 8, 128], strides = [1, 1, 1]} : vector<5x9x128xbf16> to vector<4x8x128xbf16>
    %29 = vector.shape_cast %28 : vector<4x8x128xbf16> to vector<32x128xbf16>
    %30 = vector.extract_strided_slice %4 {offsets = [1, 1, 0], sizes = [4, 8, 128], strides = [1, 1, 1]} : vector<5x9x128xbf16> to vector<4x8x128xbf16>
    %31 = vector.shape_cast %30 : vector<4x8x128xbf16> to vector<32x128xbf16>
    %32 = tpu.concatenate %6, %11, %13, %18, %23, %25, %27, %29, %31 in 1 : vector<32x128xbf16>, vector<32x128xbf16>, vector<32x128xbf16>, vector<32x128xbf16>, vector<32x128xbf16>, vector<32x128xbf16>, vector<32x128xbf16>, vector<32x128xbf16>, vector<32x128xbf16> -> vector<32x1152xbf16>
    %c0_12 = arith.constant 0 : index
    %c0_13 = arith.constant 0 : index
    %33 = vector.load %arg3[%c0_12, %c0_13] : memref<1152x128xbf16, #tpu.memory_space<vmem>>, vector<1152x128xbf16>
    %cst = arith.constant dense<0.000000e+00> : vector<32x128xf32>
    %34 = tpu.matmul %32, %33, %cst {dimension_numbers = #tpu.dot_dimension_numbers<[1], [0], [0], [1], [0, 0, 1, 1], [], []>} : vector<32x1152xbf16>, vector<1152x128xbf16>, vector<32x128xf32> -> vector<32x128xf32>
    %c0_14 = arith.constant 0 : index
    %c0_15 = arith.constant 0 : index
    %35 = vector.load %arg4[%c0_14, %c0_15] : memref<1x128xf32, #tpu.memory_space<vmem>>, vector<1x128xf32>
    %36 = vector.broadcast %35 : vector<1x128xf32> to vector<32x128xf32>
    %37 = arith.mulf %34, %36 : vector<32x128xf32>
    %c0_16 = arith.constant 0 : index
    %c0_17 = arith.constant 0 : index
    %38 = vector.load %arg5[%c0_16, %c0_17] : memref<1x128xf32, #tpu.memory_space<vmem>>, vector<1x128xf32>
    %39 = vector.broadcast %38 : vector<1x128xf32> to vector<32x128xf32>
    %40 = arith.addf %37, %39 : vector<32x128xf32>
    %cst_18 = arith.constant 0.000000e+00 : f32
    %41 = vector.broadcast %cst_18 : f32 to vector<32x128xf32>
    %42 = arith.maximumf %40, %41 : vector<32x128xf32>
    %43 = arith.truncf %42 : vector<32x128xf32> to vector<32x128xbf16>
    %c0_19 = arith.constant 0 : index
    %c0_20 = arith.constant 0 : index
    %44 = vector.load %arg6[%c0_19, %c0_20] : memref<128x128xbf16, #tpu.memory_space<vmem>>, vector<128x128xbf16>
    %cst_21 = arith.constant dense<0.000000e+00> : vector<32x128xf32>
    %45 = tpu.matmul %43, %44, %cst_21 {dimension_numbers = #tpu.dot_dimension_numbers<[1], [0], [0], [1], [0, 0, 1, 1], [], []>} : vector<32x128xbf16>, vector<128x128xbf16>, vector<32x128xf32> -> vector<32x128xf32>
    %c0_22 = arith.constant 0 : index
    %c0_23 = arith.constant 0 : index
    %c0_24 = arith.constant 0 : index
    %46 = vector.load %arg7[%c0_22, %c0_23, %c0_24] : memref<1x32x128xbf16, #tpu.memory_space<vmem>>, vector<1x32x128xbf16>
    %47 = vector.shape_cast %46 : vector<1x32x128xbf16> to vector<32x128xbf16>
    %48 = arith.extf %47 : vector<32x128xbf16> to vector<32x128xf32>
    %c0_25 = arith.constant 0 : index
    %c0_26 = arith.constant 0 : index
    %49 = vector.load %arg8[%c0_25, %c0_26] : memref<1x128xf32, #tpu.memory_space<vmem>>, vector<1x128xf32>
    %50 = vector.broadcast %49 : vector<1x128xf32> to vector<32x128xf32>
    %51 = arith.mulf %48, %50 : vector<32x128xf32>
    %c0_27 = arith.constant 0 : index
    %c0_28 = arith.constant 0 : index
    %52 = vector.load %arg9[%c0_27, %c0_28] : memref<1x128xf32, #tpu.memory_space<vmem>>, vector<1x128xf32>
    %53 = vector.broadcast %52 : vector<1x128xf32> to vector<32x128xf32>
    %54 = arith.addf %51, %53 : vector<32x128xf32>
    %cst_29 = arith.constant 0.000000e+00 : f32
    %55 = vector.broadcast %cst_29 : f32 to vector<32x128xf32>
    %56 = arith.maximumf %54, %55 : vector<32x128xf32>
    %57 = arith.truncf %56 : vector<32x128xf32> to vector<32x128xbf16>
    %c0_30 = arith.constant 0 : index
    %c0_31 = arith.constant 0 : index
    %58 = vector.load %arg10[%c0_30, %c0_31] : memref<128x128xbf16, #tpu.memory_space<vmem>>, vector<128x128xbf16>
    %cst_32 = arith.constant dense<0.000000e+00> : vector<32x128xf32>
    %59 = tpu.matmul %57, %58, %cst_32 {dimension_numbers = #tpu.dot_dimension_numbers<[1], [0], [0], [1], [0, 0, 1, 1], [], []>} : vector<32x128xbf16>, vector<128x128xbf16>, vector<32x128xf32> -> vector<32x128xf32>
    %60 = arith.addf %45, %59 : vector<32x128xf32>
    %c0_33 = arith.constant 0 : index
    %c0_34 = arith.constant 0 : index
    %c0_35 = arith.constant 0 : index
    %61 = vector.load %arg11[%c0_33, %c0_34, %c0_35] : memref<1x32x128xf32, #tpu.memory_space<vmem>>, vector<1x32x128xf32>
    %62 = vector.shape_cast %61 : vector<1x32x128xf32> to vector<32x128xf32>
    %63 = vector.shape_cast %60 : vector<32x128xf32> to vector<1x32x128xf32>
    tpu.vector_store %arg11[%c0_33, %c0_34, %c0_35], %63 {strides = array<i32>} : memref<1x32x128xf32, #tpu.memory_space<vmem>>, vector<1x32x128xf32>,
    return
  }
  func.func @transform_0(%arg0: i32, %arg1: i32) -> (i32, i32, i32, i32, i32) {
    %c0_i32 = arith.constant 0 : i32
    %c0_i32_0 = arith.constant 0 : i32
    %c0_i32_1 = arith.constant 0 : i32
    %c0_i32_2 = arith.constant 0 : i32
    %c0_i32_3 = arith.constant 0 : i32
    return %arg0, %c0_i32, %c0_i32_0, %c0_i32_1, %c0_i32_2 : i32, i32, i32, i32, i32
  }
  func.func @transform_1(%arg0: i32, %arg1: i32) -> (i32, i32) {
    %c0_i32 = arith.constant 0 : i32
    %c0_i32_0 = arith.constant 0 : i32
    %c0_i32_1 = arith.constant 0 : i32
    return %c0_i32, %c0_i32_0 : i32, i32
  }
  func.func @transform_2(%arg0: i32, %arg1: i32) -> (i32, i32) {
    %c0_i32 = arith.constant 0 : i32
    %c0_i32_0 = arith.constant 0 : i32
    %c0_i32_1 = arith.constant 0 : i32
    return %c0_i32, %c0_i32_0 : i32, i32
  }
  func.func @transform_3(%arg0: i32, %arg1: i32) -> (i32, i32) {
    %c0_i32 = arith.constant 0 : i32
    %c0_i32_0 = arith.constant 0 : i32
    %c0_i32_1 = arith.constant 0 : i32
    return %c0_i32, %c0_i32_0 : i32, i32
  }
  func.func @transform_4(%arg0: i32, %arg1: i32) -> (i32, i32) {
    %c0_i32 = arith.constant 0 : i32
    %c0_i32_0 = arith.constant 0 : i32
    %c0_i32_1 = arith.constant 0 : i32
    return %c0_i32, %c0_i32_0 : i32, i32
  }
  func.func @transform_5(%arg0: i32, %arg1: i32) -> (i32, i32, i32) {
    %c0_i32 = arith.constant 0 : i32
    %c0_i32_0 = arith.constant 0 : i32
    return %arg0, %arg1, %c0_i32 : i32, i32, i32
  }
  func.func @transform_6(%arg0: i32, %arg1: i32) -> (i32, i32) {
    %c0_i32 = arith.constant 0 : i32
    %c0_i32_0 = arith.constant 0 : i32
    %c0_i32_1 = arith.constant 0 : i32
    return %c0_i32, %c0_i32_0 : i32, i32
  }
  func.func @transform_7(%arg0: i32, %arg1: i32) -> (i32, i32) {
    %c0_i32 = arith.constant 0 : i32
    %c0_i32_0 = arith.constant 0 : i32
    %c0_i32_1 = arith.constant 0 : i32
    return %c0_i32, %c0_i32_0 : i32, i32
  }
  func.func @transform_8(%arg0: i32, %arg1: i32) -> (i32, i32) {
    %c0_i32 = arith.constant 0 : i32
    %c0_i32_0 = arith.constant 0 : i32
    %c0_i32_1 = arith.constant 0 : i32
    return %c0_i32, %c0_i32_0 : i32, i32
  }
  func.func @transform_9(%arg0: i32, %arg1: i32) -> (i32, i32, i32) {
    %c0_i32 = arith.constant 0 : i32
    %c0_i32_0 = arith.constant 0 : i32
    return %arg0, %arg1, %c0_i32 : i32, i32, i32
  }
}

</mosaic_0001>

<llo_original>
// kernel: preact_bottleneck_forward.2
$region0: #{preact_bottleneck_forward.2}
  #allocation0 [shape = 'u32[]', space=smem, size = 0x4, offset = 0x4, fixed_abs, tag = 'smem constant byte address 0x4 - core index']
  #allocation1 [shape = 'u32[144,128]{1,0:T(1,128)}', space=vmem, size = 0x12000, scoped, tag = 'internal scratch']
  %s0 = inlined_call_operand.vmem [shape: bf16[512,128], index: 0, kind: input, shape index: {}]
  %s1 = inlined_call_operand.vmem [shape: f32[1,128], index: 1, kind: input, shape index: {}]
  %s2 = inlined_call_operand.vmem [shape: f32[1,128], index: 2, kind: input, shape index: {}]
  %s3 = inlined_call_operand.vmem [shape: bf16[128,128], index: 3, kind: input, shape index: {}]
  %s4 = inlined_call_operand.vmem [shape: f32[1,128], index: 4, kind: input, shape index: {}]
  %s5 = inlined_call_operand.vmem [shape: f32[1,128], index: 5, kind: input, shape index: {}]
  %s6 = inlined_call_operand.vmem [shape: bf16[512,128], index: 6, kind: output, shape index: {}]
  %s7 = sld [smem:[#allocation0]]
  $region57: #{preact_bottleneck_forward.2} parent=0
    _
  %s9 = ssub.s32 1, %s7
  %s10 = scalar_select 0, %s9, %s7
  loop: start=0, step=1, limit=4
  $region2: #{preact_bottleneck_forward.2} parent=0 // loop_pre_header
    _
  $region3: #{preact_bottleneck_forward.2} parent=0 // loop_header
    %s12 = sphi 0, %s16
    %p13 = scmp.ge.s32.totalorder %s12, 4
    %s22 = sphi 0, %s24
    %s25 = sphi 0, %s22
    %s26 = sphi 0, %s25
    %s42 = sphi 0, %s26
    %s46 = sphi 0, %s46
    %s48 = sphi 0, %s46
    %s49 = sphi 0, %s48
    %s63 = sphi 0, %s49
    %s67 = sphi 0, %s67
    %s69 = sphi 0, %s67
    %s70 = sphi 0, %s69
    %s84 = sphi 0, %s70
    %s88 = sphi 0, %s88
    %s90 = sphi 0, %s88
    %s91 = sphi 0, %s90
    %s105 = sphi 0, %s91
    %s109 = sphi 0, %s109
    %s111 = sphi 0, %s109
    %s112 = sphi 0, %s111
    %s126 = sphi 0, %s112
    %s130 = sphi 0, %s130
    %s132 = sphi 0, %s130
    %s133 = sphi 0, %s132
    %s147 = sphi 0, %s133
    %s153 = sphi 0, %s155
    %s156 = sphi 0, %s153
    %s157 = sphi 0, %s156
    %s173 = sphi 0, %s157
  $region4: #{preact_bottleneck_forward.2} parent=0 // loop_header_branch
    %15 = sbr.rel (%p13) target = $region8
  $region5: #{preact_bottleneck_forward.2} parent=0 // loop_body
    %s17 = ssub.s32 %s12, 1
    %s18 = ssub.s32 %s12, 2
    %s19 = sadd.s32 %s12, 1
    %s20 = ssub.s32 %s12, %s19
    %p21 = scmp.eq.s32.totalorder %s20, 0
    %s23 = sadd.s32 %s22, 1
    %s24 = scalar_select %p21, %s22, %s23
    %p27 = pneg %p21
    %p28 = scmp.eq.s32.totalorder %s12, 1
    %p29 = por %p27, %p28
    %p30 = scmp.ne.s32.totalorder %s22, %s25
    %p31 = scmp.eq.s32.totalorder %s12, 0
    %p32 = por %p30, %p31
    %p33 = scmp.ne.s32.totalorder %s22, %s25
    %p34 = scmp.eq.s32.totalorder %s17, 1
    %p35 = por %p33, %p34
    %p36 = scmp.ne.s32.totalorder %s25, %s26
    %p37 = scmp.eq.s32.totalorder %s17, 0
    %p38 = por %p36, %p37
    %p39 = scmp.ne.s32.totalorder %s25, %s26
    %p40 = scmp.eq.s32.totalorder %s18, 1
    %p41 = por %p39, %p40
    %p43 = scmp.ne.s32.totalorder %s26, %s42
    %p44 = scmp.eq.s32.totalorder %s18, 0
    %p45 = por %p43, %p44
    %s47 = sadd.s32 %s46, 1
    %p50 = scmp.eq.s32.totalorder %s12, 1
    %p51 = scmp.ne.s32.totalorder %s46, %s48
    %p52 = scmp.eq.s32.totalorder %s12, 0
    %p53 = por %p51, %p52
    %p54 = scmp.ne.s32.totalorder %s46, %s48
    %p55 = scmp.eq.s32.totalorder %s17, 1
    %p56 = por %p54, %p55
    %p57 = scmp.ne.s32.totalorder %s48, %s49
    %p58 = scmp.eq.s32.totalorder %s17, 0
    %p59 = por %p57, %p58
    %p60 = scmp.ne.s32.totalorder %s48, %s49
    %p61 = scmp.eq.s32.totalorder %s18, 1
    %p62 = por %p60, %p61
    %p64 = scmp.ne.s32.totalorder %s49, %s63
    %p65 = scmp.eq.s32.totalorder %s18, 0
    %p66 = por %p64, %p65
    %s68 = sadd.s32 %s67, 1
    %p71 = scmp.eq.s32.totalorder %s12, 1
    %p72 = scmp.ne.s32.totalorder %s67, %s69
    %p73 = scmp.eq.s32.totalorder %s12, 0
    %p74 = por %p72, %p73
    %p75 = scmp.ne.s32.totalorder %s67, %s69
    %p76 = scmp.eq.s32.totalorder %s17, 1
    %p77 = por %p75, %p76
    %p78 = scmp.ne.s32.totalorder %s69, %s70
    %p79 = scmp.eq.s32.totalorder %s17, 0
    %p80 = por %p78, %p79
    %p81 = scmp.ne.s32.totalorder %s69, %s70
    %p82 = scmp.eq.s32.totalorder %s18, 1
    %p83 = por %p81, %p82
    %p85 = scmp.ne.s32.totalorder %s70, %s84
    %p86 = scmp.eq.s32.totalorder %s18, 0
    %p87 = por %p85, %p86
    %s89 = sadd.s32 %s88, 1
    %p92 = scmp.eq.s32.totalorder %s12, 1
    %p93 = scmp.ne.s32.totalorder %s88, %s90
    %p94 = scmp.eq.s32.totalorder %s12, 0
    %p95 = por %p93, %p94
    %p96 = scmp.ne.s32.totalorder %s88, %s90
    %p97 = scmp.eq.s32.totalorder %s17, 1
    %p98 = por %p96, %p97
    %p99 = scmp.ne.s32.totalorder %s90, %s91
    %p100 = scmp.eq.s32.totalorder %s17, 0
    %p101 = por %p99, %p100
    %p102 = scmp.ne.s32.totalorder %s90, %s91
    %p103 = scmp.eq.s32.totalorder %s18, 1
    %p104 = por %p102, %p103
    %p106 = scmp.ne.s32.totalorder %s91, %s105
    %p107 = scmp.eq.s32.totalorder %s18, 0
    %p108 = por %p106, %p107
    %s110 = sadd.s32 %s109, 1
    %p113 = scmp.eq.s32.totalorder %s12, 1
    %p114 = scmp.ne.s32.totalorder %s109, %s111
    %p115 = scmp.eq.s32.totalorder %s12, 0
    %p116 = por %p114, %p115
    %p117 = scmp.ne.s32.totalorder %s109, %s111
    %p118 = scmp.eq.s32.totalorder %s17, 1
    %p119 = por %p117, %p118
    %p120 = scmp.ne.s32.totalorder %s111, %s112
    %p121 = scmp.eq.s32.totalorder %s17, 0
    %p122 = por %p120, %p121
    %p123 = scmp.ne.s32.totalorder %s111, %s112
    %p124 = scmp.eq.s32.totalorder %s18, 1
    %p125 = por %p123, %p124
    %p127 = scmp.ne.s32.totalorder %s112, %s126
    %p128 = scmp.eq.s32.totalorder %s18, 0
    %p129 = por %p127, %p128
    %s131 = sadd.s32 %s130, 1
    %p134 = scmp.eq.s32.totalorder %s12, 1
    %p135 = scmp.ne.s32.totalorder %s130, %s132
    %p136 = scmp.eq.s32.totalorder %s12, 0
    %p137 = por %p135, %p136
    %p138 = scmp.ne.s32.totalorder %s130, %s132
    %p139 = scmp.eq.s32.totalorder %s17, 1
    %p140 = por %p138, %p139
    %p141 = scmp.ne.s32.totalorder %s132, %s133
    %p142 = scmp.eq.s32.totalorder %s17, 0
    %p143 = por %p141, %p142
    %p144 = scmp.ne.s32.totalorder %s132, %s133
    %p145 = scmp.eq.s32.totalorder %s18, 1
    %p146 = por %p144, %p145
    %p148 = scmp.ne.s32.totalorder %s133, %s147
    %p149 = scmp.eq.s32.totalorder %s18, 0
    %p150 = por %p148, %p149
    %s151 = ssub.s32 %s12, %s19
    %p152 = scmp.eq.s32.totalorder %s151, 0
    %s154 = sadd.s32 %s153, 1
    %s155 = scalar_select %p152, %s153, %s154
    %p158 = pneg %p152
    %p159 = scmp.eq.s32.totalorder %s12, 1
    %p160 = por %p158, %p159
    %p161 = scmp.ne.s32.totalorder %s153, %s156
    %p162 = scmp.eq.s32.totalorder %s12, 0
    %p163 = por %p161, %p162
    %p164 = scmp.ne.s32.totalorder %s153, %s156
    %p165 = scmp.eq.s32.totalorder %s17, 1
    %p166 = por %p164, %p165
    %p167 = scmp.ne.s32.totalorder %s156, %s157
    %p168 = scmp.eq.s32.totalorder %s17, 0
    %p169 = por %p167, %p168
    %p170 = scmp.ne.s32.totalorder %s156, %s157
    %p171 = scmp.eq.s32.totalorder %s18, 1
    %p172 = por %p170, %p171
    %p174 = scmp.ne.s32.totalorder %s157, %s173
    %p175 = scmp.eq.s32.totalorder %s18, 0
    %p176 = por %p174, %p175
    %p177 = scmp.le.s32.totalorder 1, %s12
    %p178 = scmp.lt.s32.totalorder %s12, 3
    %p179 = pnand %p177, %p178
    %p180 = pneg %p179
    // Predicated region
    $region9: #{preact_bottleneck_forward.2} parent=5 // pred_check
      _
    $region10: #{preact_bottleneck_forward.2} parent=5 // pred_check_branch
      %182 = sbr.rel (%p179) target = $region12
    $region11: #{preact_bottleneck_forward.2} parent=5 // pred_region
      %s183 = ssub.s32 %s12, 1
      // Predicated region
      $region13: #{preact_bottleneck_forward.2} parent=11 // pred_check
        %p184 = pneg %p59
      $region14: #{preact_bottleneck_forward.2} parent=11 // pred_check_branch
        %186 = sbr.rel (%p184) target = $region16
      $region15: #{preact_bottleneck_forward.2} parent=11 // pred_region
        _
      $region16: #{preact_bottleneck_forward.2} parent=11 // pred_fallthru
        _
      // Predicated region
      $region17: #{preact_bottleneck_forward.2} parent=11 // pred_check
        %p187 = pneg %p80
      $region18: #{preact_bottleneck_forward.2} parent=11 // pred_check_branch
        %189 = sbr.rel (%p187) target = $region20
      $region19: #{preact_bottleneck_forward.2} parent=11 // pred_region
        _
      $region20: #{preact_bottleneck_forward.2} parent=11 // pred_fallthru
        _
      // Predicated region
      $region21: #{preact_bottleneck_forward.2} parent=11 // pred_check
        %p190 = pneg %p101
      $region22: #{preact_bottleneck_forward.2} parent=11 // pred_check_branch
        %192 = sbr.rel (%p190) target = $region24
      $region23: #{preact_bottleneck_forward.2} parent=11 // pred_region
        _
      $region24: #{preact_bottleneck_forward.2} parent=11 // pred_fallthru
        _
      // Predicated region
      $region25: #{preact_bottleneck_forward.2} parent=11 // pred_check
        %p193 = pneg %p122
      $region26: #{preact_bottleneck_forward.2} parent=11 // pred_check_branch
        %195 = sbr.rel (%p193) target = $region28
      $region27: #{preact_bottleneck_forward.2} parent=11 // pred_region
        _
      $region28: #{preact_bottleneck_forward.2} parent=11 // pred_fallthru
        _
      // Predicated region
      $region29: #{preact_bottleneck_forward.2} parent=11 // pred_check
        %p196 = pneg %p143
      $region30: #{preact_bottleneck_forward.2} parent=11 // pred_check_branch
        %198 = sbr.rel (%p196) target = $region32
      $region31: #{preact_bottleneck_forward.2} parent=11 // pred_region
        _
      $region32: #{preact_bottleneck_forward.2} parent=11 // pred_fallthru
        _
    $region12: #{preact_bottleneck_forward.2} parent=5 // pred_fallthru
      _
    %p199 = scmp.lt.s32.totalorder %s12, 2
    // Predicated region
    $region33: #{preact_bottleneck_forward.2} parent=5 // pred_check
      %p200 = pneg %p199
    $region34: #{preact_bottleneck_forward.2} parent=5 // pred_check_branch
      %202 = sbr.rel (%p200) target = $region36
    $region35: #{preact_bottleneck_forward.2} parent=5 // pred_region
      // Predicated region
      $region37: #{preact_bottleneck_forward.2} parent=35 // pred_check
        %p203 = pneg %p32
      $region38: #{preact_bottleneck_forward.2} parent=35 // pred_check_branch
        %205 = sbr.rel (%p203) target = $region40
      $region39: #{preact_bottleneck_forward.2} parent=35 // pred_region
        %s206 = smul.u32 32, %s12
        %p207 = scmp.lt.s32.totalorder %s206, 63
        %s208 = scalar_select %p207, %s206, 63
        %s209 = smul.addr %s208, 4
        %s210 = scalar_lea.vmem %s0, %s209
        %s211 = smul.u32 32, %s12
      $region40: #{preact_bottleneck_forward.2} parent=35 // pred_fallthru
        _
    $region36: #{preact_bottleneck_forward.2} parent=5 // pred_fallthru
      _
    %p212 = scmp.le.s32.totalorder 1, %s12
    %p213 = scmp.lt.s32.totalorder %s12, 3
    %p214 = pnand %p212, %p213
    %p215 = pneg %p214
    // Predicated region
    $region41: #{preact_bottleneck_forward.2} parent=5 // pred_check
      _
    $region42: #{preact_bottleneck_forward.2} parent=5 // pred_check_branch
      %217 = sbr.rel (%p214) target = $region44
    $region43: #{preact_bottleneck_forward.2} parent=5 // pred_region
      %s218 = ssub.s32 %s12, 1
      %s219 = smul.u32 32, %s17
      %p220 = scmp.lt.s32.totalorder %s219, 63
      %s221 = scalar_select %p220, %s219, 63
      %s222 = smul.addr %s221, 4
      %s223 = scalar_lea.vmem %s0, %s222
      %p224 = pneg %p38
      %p225 = pneg %p35
      %p226 = pneg %p59
      %p227 = pneg %p56
      %p228 = pneg %p80
      %p229 = pneg %p77
      %p230 = pneg %p101
      %p231 = pneg %p98
      %p232 = pneg %p122
      %p233 = pneg %p119
      %p234 = pneg %p143
      %p235 = pneg %p140
      %p236 = pneg %p169
      %p237 = pneg %p166
      %s238 = smul.u32 32, %s17
      %p239 = scmp.lt.s32.totalorder %s238, 63
      %s240 = scalar_select %p239, %s238, 63
      %s241 = smul.addr %s240, 4
      %s242 = scalar_lea.vmem %s6, %s241
      %s243 = smul.u32 32, %s17
      %p244 = scmp.lt.s32.totalorder %s243, 63
      %s245 = scalar_select %p244, %s243, 63
      %s246 = smul.addr %s245, 4
      %s247 = scalar_lea.vmem %s0, %s246
      %s248 = smul.u32 32, %s17
      %s249 = smul.u32 32, %s17
      %p250 = scmp.lt.s32.totalorder %s249, 63
      %s251 = scalar_select %p250, %s249, 63
      %s252 = smul.addr %s251, 4
      %s253 = scalar_lea.vmem %s6, %s252
      %s254 = smul.u32 32, %s17
      %v256 = vld [vmem:[%s247] sm:$0xf]
      %v257 = vld [vmem:[%s247 + $0x4] sm:$0xf]
      %v258 = vld [vmem:[%s247 + $0x8] sm:$0xf]
      %v259 = vld [vmem:[%s247 + $0xc] sm:$0xf]
      %v260 = vld [vmem:[%s247 + $0x10] sm:$0xf]
      %v261 = vld [vmem:[%s247 + $0x14] sm:$0xf]
      %v262 = vld [vmem:[%s247 + $0x18] sm:$0xf]
      %v263 = vld [vmem:[%s247 + $0x1c] sm:$0xf]
      %v264 = vld [vmem:[%s247 + $0x20] sm:$0xf]
      %v265 = vld [vmem:[%s247 + $0x24] sm:$0xf]
      %v266 = vld [vmem:[%s247 + $0x28] sm:$0xf]
      %v267 = vld [vmem:[%s247 + $0x2c] sm:$0xf]
      %v268 = vld [vmem:[%s247 + $0x30] sm:$0xf]
      %v269 = vld [vmem:[%s247 + $0x34] sm:$0xf]
      %v270 = vld [vmem:[%s247 + $0x38] sm:$0xf]
      %v271 = vld [vmem:[%s247 + $0x3c] sm:$0xf]
      %v272 = vld [vmem:[%s247 + $0x40] sm:$0xf]
      %v273 = vld [vmem:[%s247 + $0x44] sm:$0xf]
      %v274 = vld [vmem:[%s247 + $0x48] sm:$0xf]
      %v275 = vld [vmem:[%s247 + $0x4c] sm:$0xf]
      %v276 = vld [vmem:[%s247 + $0x50] sm:$0xf]
      %v277 = vld [vmem:[%s247 + $0x54] sm:$0xf]
      %v278 = vld [vmem:[%s247 + $0x58] sm:$0xf]
      %v279 = vld [vmem:[%s247 + $0x5c] sm:$0xf]
      %v280 = vld [vmem:[%s247 + $0x60] sm:$0xf]
      %v281 = vld [vmem:[%s247 + $0x64] sm:$0xf]
      %v282 = vld [vmem:[%s247 + $0x68] sm:$0xf]
      %v283 = vld [vmem:[%s247 + $0x6c] sm:$0xf]
      %v284 = vld [vmem:[%s247 + $0x70] sm:$0xf]
      %v285 = vld [vmem:[%s247 + $0x74] sm:$0xf]
      %v286 = vld [vmem:[%s247 + $0x78] sm:$0xf]
      %v287 = vld [vmem:[%s247 + $0x7c] sm:$0xf]
      %v288 = vunpack.c.l.bf16 %v256
      %v289 = vunpack.c.l.bf16 %v257
      %v290 = vunpack.c.l.bf16 %v258
      %v291 = vunpack.c.l.bf16 %v259
      %v292 = vunpack.c.l.bf16 %v260
      %v293 = vunpack.c.l.bf16 %v261
      %v294 = vunpack.c.l.bf16 %v262
      %v295 = vunpack.c.l.bf16 %v263
      %v296 = vunpack.c.l.bf16 %v264
      %v297 = vunpack.c.l.bf16 %v265
      %v298 = vunpack.c.l.bf16 %v266
      %v299 = vunpack.c.l.bf16 %v267
      %v300 = vunpack.c.l.bf16 %v268
      %v301 = vunpack.c.l.bf16 %v269
      %v302 = vunpack.c.l.bf16 %v270
      %v303 = vunpack.c.l.bf16 %v271
      %v304 = vunpack.c.l.bf16 %v272
      %v305 = vunpack.c.l.bf16 %v273
      %v306 = vunpack.c.l.bf16 %v274
      %v307 = vunpack.c.l.bf16 %v275
      %v308 = vunpack.c.l.bf16 %v276
      %v309 = vunpack.c.l.bf16 %v277
      %v310 = vunpack.c.l.bf16 %v278
      %v311 = vunpack.c.l.bf16 %v279
      %v312 = vunpack.c.l.bf16 %v280
      %v313 = vunpack.c.l.bf16 %v281
      %v314 = vunpack.c.l.bf16 %v282
      %v315 = vunpack.c.l.bf16 %v283
      %v316 = vunpack.c.l.bf16 %v284
      %v317 = vunpack.c.l.bf16 %v285
      %v318 = vunpack.c.l.bf16 %v286
      %v319 = vunpack.c.l.bf16 %v287
      %v320 = vld [vmem:[%s1] sm:$0x1]
      %v322 = vlaneseq
      %v323 = vshrl.u32 %v322, 7
      %v324 = vsub.s32 0, %v323
      %v325 = vrot.slane %v320, %v324
      %v327 = vmul.f32 %v288, %v325
      %v328 = vmul.f32 %v289, %v325
      %v329 = vmul.f32 %v290, %v325
      %v330 = vmul.f32 %v291, %v325
      %v331 = vmul.f32 %v292, %v325
      %v332 = vmul.f32 %v293, %v325
      %v333 = vmul.f32 %v294, %v325
      %v334 = vmul.f32 %v295, %v325
      %v335 = vmul.f32 %v296, %v325
      %v336 = vmul.f32 %v297, %v325
      %v337 = vmul.f32 %v298, %v325
      %v338 = vmul.f32 %v299, %v325
      %v339 = vmul.f32 %v300, %v325
      %v340 = vmul.f32 %v301, %v325
      %v341 = vmul.f32 %v302, %v325
      %v342 = vmul.f32 %v303, %v325
      %v343 = vmul.f32 %v304, %v325
      %v344 = vmul.f32 %v305, %v325
      %v345 = vmul.f32 %v306, %v325
      %v346 = vmul.f32 %v307, %v325
      %v347 = vmul.f32 %v308, %v325
      %v348 = vmul.f32 %v309, %v325
      %v349 = vmul.f32 %v310, %v325
      %v350 = vmul.f32 %v311, %v325
      %v351 = vmul.f32 %v312, %v325
      %v352 = vmul.f32 %v313, %v325
      %v353 = vmul.f32 %v314, %v325
      %v354 = vmul.f32 %v315, %v325
      %v355 = vmul.f32 %v316, %v325
      %v356 = vmul.f32 %v317, %v325
      %v357 = vmul.f32 %v318, %v325
      %v358 = vmul.f32 %v319, %v325
      %v359 = vld [vmem:[%s2] sm:$0x1]
      %v361 = vlaneseq
      %v362 = vshrl.u32 %v361, 7
      %v363 = vsub.s32 0, %v362
      %v364 = vrot.slane %v359, %v363
      %v366 = vadd.f32 %v327, %v364
      %v367 = vadd.f32 %v328, %v364
      %v368 = vadd.f32 %v329, %v364
      %v369 = vadd.f32 %v330, %v364
      %v370 = vadd.f32 %v331, %v364
      %v371 = vadd.f32 %v332, %v364
      %v372 = vadd.f32 %v333, %v364
      %v373 = vadd.f32 %v334, %v364
      %v374 = vadd.f32 %v335, %v364
      %v375 = vadd.f32 %v336, %v364
      %v376 = vadd.f32 %v337, %v364
      %v377 = vadd.f32 %v338, %v364
      %v378 = vadd.f32 %v339, %v364
      %v379 = vadd.f32 %v340, %v364
      %v380 = vadd.f32 %v341, %v364
      %v381 = vadd.f32 %v342, %v364
      %v382 = vadd.f32 %v343, %v364
      %v383 = vadd.f32 %v344, %v364
      %v384 = vadd.f32 %v345, %v364
      %v385 = vadd.f32 %v346, %v364
      %v386 = vadd.f32 %v347, %v364
      %v387 = vadd.f32 %v348, %v364
      %v388 = vadd.f32 %v349, %v364
      %v389 = vadd.f32 %v350, %v364
      %v390 = vadd.f32 %v351, %v364
      %v391 = vadd.f32 %v352, %v364
      %v392 = vadd.f32 %v353, %v364
      %v393 = vadd.f32 %v354, %v364
      %v394 = vadd.f32 %v355, %v364
      %v395 = vadd.f32 %v356, %v364
      %v396 = vadd.f32 %v357, %v364
      %v397 = vadd.f32 %v358, %v364
      %v398 = vmax.f32 %v366, 0.0
      %v399 = vmax.f32 %v367, 0.0
      %v400 = vmax.f32 %v368, 0.0
      %v401 = vmax.f32 %v369, 0.0
      %v402 = vmax.f32 %v370, 0.0
      %v403 = vmax.f32 %v371, 0.0
      %v404 = vmax.f32 %v372, 0.0
      %v405 = vmax.f32 %v373, 0.0
      %v406 = vmax.f32 %v374, 0.0
      %v407 = vmax.f32 %v375, 0.0
      %v408 = vmax.f32 %v376, 0.0
      %v409 = vmax.f32 %v377, 0.0
      %v410 = vmax.f32 %v378, 0.0
      %v411 = vmax.f32 %v379, 0.0
      %v412 = vmax.f32 %v380, 0.0
      %v413 = vmax.f32 %v381, 0.0
      %v414 = vmax.f32 %v382, 0.0
      %v415 = vmax.f32 %v383, 0.0
      %v416 = vmax.f32 %v384, 0.0
      %v417 = vmax.f32 %v385, 0.0
      %v418 = vmax.f32 %v386, 0.0
      %v419 = vmax.f32 %v387, 0.0
      %v420 = vmax.f32 %v388, 0.0
      %v421 = vmax.f32 %v389, 0.0
      %v422 = vmax.f32 %v390, 0.0
      %v423 = vmax.f32 %v391, 0.0
      %v424 = vmax.f32 %v392, 0.0
      %v425 = vmax.f32 %v393, 0.0
      %v426 = vmax.f32 %v394, 0.0
      %v427 = vmax.f32 %v395, 0.0
      %v428 = vmax.f32 %v396, 0.0
      %v429 = vmax.f32 %v397, 0.0
      %v430 = vpack.c.bf16 %v399, %v398
      %v431 = vpack.c.bf16 %v401, %v400
      %v432 = vpack.c.bf16 %v403, %v402
      %v433 = vpack.c.bf16 %v405, %v404
      %v434 = vpack.c.bf16 %v407, %v406
      %v435 = vpack.c.bf16 %v409, %v408
      %v436 = vpack.c.bf16 %v411, %v410
      %v437 = vpack.c.bf16 %v413, %v412
      %v438 = vpack.c.bf16 %v415, %v414
      %v439 = vpack.c.bf16 %v417, %v416
      %v440 = vpack.c.bf16 %v419, %v418
      %v441 = vpack.c.bf16 %v421, %v420
      %v442 = vpack.c.bf16 %v423, %v422
      %v443 = vpack.c.bf16 %v425, %v424
      %v444 = vpack.c.bf16 %v427, %v426
      %v445 = vpack.c.bf16 %v429, %v428
      %v446 = vld [vmem:[%s3] sm:$0xf]
      %v447 = vld [vmem:[%s3 + $0x4] sm:$0xf]
      %v448 = vld [vmem:[%s3 + $0x8] sm:$0xf]
      %v449 = vld [vmem:[%s3 + $0xc] sm:$0xf]
      %v450 = vld [vmem:[%s3 + $0x10] sm:$0xf]
      %v451 = vld [vmem:[%s3 + $0x14] sm:$0xf]
      %v452 = vld [vmem:[%s3 + $0x18] sm:$0xf]
      %v453 = vld [vmem:[%s3 + $0x1c] sm:$0xf]
      %v454 = vld [vmem:[%s3 + $0x20] sm:$0xf]
      %v455 = vld [vmem:[%s3 + $0x24] sm:$0xf]
      %v456 = vld [vmem:[%s3 + $0x28] sm:$0xf]
      %v457 = vld [vmem:[%s3 + $0x2c] sm:$0xf]
      %v458 = vld [vmem:[%s3 + $0x30] sm:$0xf]
      %v459 = vld [vmem:[%s3 + $0x34] sm:$0xf]
      %v460 = vld [vmem:[%s3 + $0x38] sm:$0xf]
      %v461 = vld [vmem:[%s3 + $0x3c] sm:$0xf]
      %v478 = vunpack.c.l.b16 %v446
      %v479 = vunpack.c.l.b16 %v447
      %v480 = vunpack.c.l.b16 %v448
      %v481 = vunpack.c.l.b16 %v449
      %v482 = vunpack.c.l.b16 %v450
      %v483 = vunpack.c.l.b16 %v451
      %v484 = vunpack.c.l.b16 %v452
      %v485 = vunpack.c.l.b16 %v453
      %v486 = vunpack.c.l.b16 %v454
      %v487 = vunpack.c.l.b16 %v455
      %v488 = vunpack.c.l.b16 %v456
      %v489 = vunpack.c.l.b16 %v457
      %v490 = vunpack.c.l.b16 %v458
      %v491 = vunpack.c.l.b16 %v459
      %v492 = vunpack.c.l.b16 %v460
      %v493 = vunpack.c.l.b16 %v461
      %v494 = vpack.c.b16 %v479, %v478
      %v495 = vpack.c.b16 %v481, %v480
      %v496 = vpack.c.b16 %v483, %v482
      %v497 = vpack.c.b16 %v485, %v484
      %v498 = vpack.c.b16 %v487, %v486
      %v499 = vpack.c.b16 %v489, %v488
      %v500 = vpack.c.b16 %v491, %v490
      %v501 = vpack.c.b16 %v493, %v492
      %510 = vmatprep.subr.bf16.mxu0 0
      %511 = vmatpush1.bf16.msra.mxu0 %v501
      %512 = vmatprep.subr.bf16.mxu0 0
      %513 = vmatpush1.bf16.msra.mxu0 %v500
      %514 = vmatprep.subr.bf16.mxu0 0
      %515 = vmatpush1.bf16.msra.mxu0 %v499
      %516 = vmatprep.subr.bf16.mxu0 0
      %517 = vmatpush1.bf16.msra.mxu0 %v498
      %518 = vmatprep.subr.bf16.mxu0 0
      %519 = vmatpush1.bf16.msra.mxu0 %v497
      %520 = vmatprep.subr.bf16.mxu0 0
      %521 = vmatpush1.bf16.msra.mxu0 %v496
      %522 = vmatprep.subr.bf16.mxu0 0
      %523 = vmatpush1.bf16.msra.mxu0 %v495
      %524 = vmatprep.subr.bf16.mxu0 0
      %525 = vmatpush1.bf16.msra.mxu0 %v494
      %526 = vmatprep.subr.bf16.mxu0 0
      %527 = vmatpush2.bf16.msra.mxu0 0
      %528 = vmatprep.subr.bf16.mxu0 0
      %529 = vmatpush2.bf16.msra.mxu0 0
      %530 = vmatprep.subr.bf16.mxu0 0
      %531 = vmatpush2.bf16.msra.mxu0 0
      %532 = vmatprep.subr.bf16.mxu0 0
      %533 = vmatpush2.bf16.msra.mxu0 0
      %534 = vmatprep.subr.bf16.mxu0 0
      %535 = vmatpush2.bf16.msra.mxu0 0
      %536 = vmatprep.subr.bf16.mxu0 0
      %537 = vmatpush2.bf16.msra.mxu0 0
      %538 = vmatprep.subr.bf16.mxu0 0
      %539 = vmatpush2.bf16.msra.mxu0 0
      %540 = vmatprep.subr.bf16.mxu0 0
      %541 = vmatpush2.bf16.msra.mxu0 0
      %542 = vmatprep.mubr.bf16.mxu0 0
      %543 = vmatmul.mubr.bf16.gmra.mxu0 %v430
      %v544 = vpop.f32.mrf.mxu0
      %v545 = vadd.f32 0.0, %v544
      %v546 = vpop.f32.mrf.mxu0
      %v547 = vpop.f32.mrf.mxu0
      %v548 = vadd.f32 0.0, %v547
      %v549 = vpop.f32.mrf.mxu0
      %550 = vmatprep.mubr.bf16.mxu0 0
      %551 = vmatmul.mubr.bf16.gmra.mxu0 %v431
      %v552 = vpop.f32.mrf.mxu0
      %v553 = vadd.f32 0.0, %v552
      %v554 = vpop.f32.mrf.mxu0
      %v555 = vpop.f32.mrf.mxu0
      %v556 = vadd.f32 0.0, %v555
      %v557 = vpop.f32.mrf.mxu0
      %558 = vmatprep.mubr.bf16.mxu0 0
      %559 = vmatmul.mubr.bf16.gmra.mxu0 %v432
      %v560 = vpop.f32.mrf.mxu0
      %v561 = vadd.f32 0.0, %v560
      %v562 = vpop.f32.mrf.mxu0
      %v563 = vpop.f32.mrf.mxu0
      %v564 = vadd.f32 0.0, %v563
      %v565 = vpop.f32.mrf.mxu0
      %566 = vmatprep.mubr.bf16.mxu0 0
      %567 = vmatmul.mubr.bf16.gmra.mxu0 %v433
      %v568 = vpop.f32.mrf.mxu0
      %v569 = vadd.f32 0.0, %v568
      %v570 = vpop.f32.mrf.mxu0
      %v571 = vpop.f32.mrf.mxu0
      %v572 = vadd.f32 0.0, %v571
      %v573 = vpop.f32.mrf.mxu0
      %574 = vmatprep.mubr.bf16.mxu0 0
      %575 = vmatmul.mubr.bf16.gmra.mxu0 %v434
      %v576 = vpop.f32.mrf.mxu0
      %v577 = vadd.f32 0.0, %v576
      %v578 = vpop.f32.mrf.mxu0
      %v579 = vpop.f32.mrf.mxu0
      %v580 = vadd.f32 0.0, %v579
      %v581 = vpop.f32.mrf.mxu0
      %582 = vmatprep.mubr.bf16.mxu0 0
      %583 = vmatmul.mubr.bf16.gmra.mxu0 %v435
      %v584 = vpop.f32.mrf.mxu0
      %v585 = vadd.f32 0.0, %v584
      %v586 = vpop.f32.mrf.mxu0
      %v587 = vpop.f32.mrf.mxu0
      %v588 = vadd.f32 0.0, %v587
      %v589 = vpop.f32.mrf.mxu0
      %590 = vmatprep.mubr.bf16.mxu0 0
      %591 = vmatmul.mubr.bf16.gmra.mxu0 %v436
      %v592 = vpop.f32.mrf.mxu0
      %v593 = vadd.f32 0.0, %v592
      %v594 = vpop.f32.mrf.mxu0
      %v595 = vpop.f32.mrf.mxu0
      %v596 = vadd.f32 0.0, %v595
      %v597 = vpop.f32.mrf.mxu0
      %598 = vmatprep.mubr.bf16.mxu0 0
      %599 = vmatmul.mubr.bf16.gmra.mxu0 %v437
      %v600 = vpop.f32.mrf.mxu0
      %v601 = vadd.f32 0.0, %v600
      %v602 = vpop.f32.mrf.mxu0
      %v603 = vpop.f32.mrf.mxu0
      %v604 = vadd.f32 0.0, %v603
      %v605 = vpop.f32.mrf.mxu0
      %606 = vmatprep.mubr.bf16.mxu0 0
      %607 = vmatmul.mubr.bf16.gmra.mxu0 %v438
      %v608 = vpop.f32.mrf.mxu0
      %v609 = vadd.f32 0.0, %v608
      %v610 = vpop.f32.mrf.mxu0
      %v611 = vpop.f32.mrf.mxu0
      %v612 = vadd.f32 0.0, %v611
      %v613 = vpop.f32.mrf.mxu0
      %614 = vmatprep.mubr.bf16.mxu0 0
      %615 = vmatmul.mubr.bf16.gmra.mxu0 %v439
      %v616 = vpop.f32.mrf.mxu0
      %v617 = vadd.f32 0.0, %v616
      %v618 = vpop.f32.mrf.mxu0
      %v619 = vpop.f32.mrf.mxu0
      %v620 = vadd.f32 0.0, %v619
      %v621 = vpop.f32.mrf.mxu0
      %622 = vmatprep.mubr.bf16.mxu0 0
      %623 = vmatmul.mubr.bf16.gmra.mxu0 %v440
      %v624 = vpop.f32.mrf.mxu0
      %v625 = vadd.f32 0.0, %v624
      %v626 = vpop.f32.mrf.mxu0
      %v627 = vpop.f32.mrf.mxu0
      %v628 = vadd.f32 0.0, %v627
      %v629 = vpop.f32.mrf.mxu0
      %630 = vmatprep.mubr.bf16.mxu0 0
      %631 = vmatmul.mubr.bf16.gmra.mxu0 %v441
      %v632 = vpop.f32.mrf.mxu0
      %v633 = vadd.f32 0.0, %v632
      %v634 = vpop.f32.mrf.mxu0
      %v635 = vpop.f32.mrf.mxu0
      %v636 = vadd.f32 0.0, %v635
      %v637 = vpop.f32.mrf.mxu0
      %638 = vmatprep.mubr.bf16.mxu0 0
      %639 = vmatmul.mubr.bf16.gmra.mxu0 %v442
      %v640 = vpop.f32.mrf.mxu0
      %v641 = vadd.f32 0.0, %v640
      %v642 = vpop.f32.mrf.mxu0
      %v643 = vpop.f32.mrf.mxu0
      %v644 = vadd.f32 0.0, %v643
      %v645 = vpop.f32.mrf.mxu0
      %646 = vmatprep.mubr.bf16.mxu0 0
      %647 = vmatmul.mubr.bf16.gmra.mxu0 %v443
      %v648 = vpop.f32.mrf.mxu0
      %v649 = vadd.f32 0.0, %v648
      %v650 = vpop.f32.mrf.mxu0
      %v651 = vpop.f32.mrf.mxu0
      %v652 = vadd.f32 0.0, %v651
      %v653 = vpop.f32.mrf.mxu0
      %654 = vmatprep.mubr.bf16.mxu0 0
      %655 = vmatmul.mubr.bf16.gmra.mxu0 %v444
      %v656 = vpop.f32.mrf.mxu0
      %v657 = vadd.f32 0.0, %v656
      %v658 = vpop.f32.mrf.mxu0
      %v659 = vpop.f32.mrf.mxu0
      %v660 = vadd.f32 0.0, %v659
      %v661 = vpop.f32.mrf.mxu0
      %662 = vmatprep.mubr.bf16.mxu0 0
      %663 = vmatmul.mubr.bf16.gmra.mxu0 %v445
      %v664 = vpop.f32.mrf.mxu0
      %v665 = vadd.f32 0.0, %v664
      %v666 = vpop.f32.mrf.mxu0
      %v667 = vpop.f32.mrf.mxu0
      %v668 = vadd.f32 0.0, %v667
      %v669 = vpop.f32.mrf.mxu0
      %670 = vdwg.mxu0
      %v671 = vld [vmem:[%s4] sm:$0x1]
      %v673 = vlaneseq
      %v674 = vshrl.u32 %v673, 7
      %v675 = vsub.s32 0, %v674
      %v676 = vrot.slane %v671, %v675
      %v678 = vmul.f32 %v545, %v676
      %v679 = vmul.f32 %v548, %v676
      %v680 = vmul.f32 %v553, %v676
      %v681 = vmul.f32 %v556, %v676
      %v682 = vmul.f32 %v561, %v676
      %v683 = vmul.f32 %v564, %v676
      %v684 = vmul.f32 %v569, %v676
      %v685 = vmul.f32 %v572, %v676
      %v686 = vmul.f32 %v577, %v676
      %v687 = vmul.f32 %v580, %v676
      %v688 = vmul.f32 %v585, %v676
      %v689 = vmul.f32 %v588, %v676
      %v690 = vmul.f32 %v593, %v676
      %v691 = vmul.f32 %v596, %v676
      %v692 = vmul.f32 %v601, %v676
      %v693 = vmul.f32 %v604, %v676
      %v694 = vmul.f32 %v609, %v676
      %v695 = vmul.f32 %v612, %v676
      %v696 = vmul.f32 %v617, %v676
      %v697 = vmul.f32 %v620, %v676
      %v698 = vmul.f32 %v625, %v676
      %v699 = vmul.f32 %v628, %v676
      %v700 = vmul.f32 %v633, %v676
      %v701 = vmul.f32 %v636, %v676
      %v702 = vmul.f32 %v641, %v676
      %v703 = vmul.f32 %v644, %v676
      %v704 = vmul.f32 %v649, %v676
      %v705 = vmul.f32 %v652, %v676
      %v706 = vmul.f32 %v657, %v676
      %v707 = vmul.f32 %v660, %v676
      %v708 = vmul.f32 %v665, %v676
      %v709 = vmul.f32 %v668, %v676
      %v710 = vld [vmem:[%s5] sm:$0x1]
      %v712 = vlaneseq
      %v713 = vshrl.u32 %v712, 7
      %v714 = vsub.s32 0, %v713
      %v715 = vrot.slane %v710, %v714
      %v717 = vadd.f32 %v678, %v715
      %v718 = vadd.f32 %v679, %v715
      %v719 = vadd.f32 %v680, %v715
      %v720 = vadd.f32 %v681, %v715
      %v721 = vadd.f32 %v682, %v715
      %v722 = vadd.f32 %v683, %v715
      %v723 = vadd.f32 %v684, %v715
      %v724 = vadd.f32 %v685, %v715
      %v725 = vadd.f32 %v686, %v715
      %v726 = vadd.f32 %v687, %v715
      %v727 = vadd.f32 %v688, %v715
      %v728 = vadd.f32 %v689, %v715
      %v729 = vadd.f32 %v690, %v715
      %v730 = vadd.f32 %v691, %v715
      %v731 = vadd.f32 %v692, %v715
      %v732 = vadd.f32 %v693, %v715
      %v733 = vadd.f32 %v694, %v715
      %v734 = vadd.f32 %v695, %v715
      %v735 = vadd.f32 %v696, %v715
      %v736 = vadd.f32 %v697, %v715
      %v737 = vadd.f32 %v698, %v715
      %v738 = vadd.f32 %v699, %v715
      %v739 = vadd.f32 %v700, %v715
      %v740 = vadd.f32 %v701, %v715
      %v741 = vadd.f32 %v702, %v715
      %v742 = vadd.f32 %v703, %v715
      %v743 = vadd.f32 %v704, %v715
      %v744 = vadd.f32 %v705, %v715
      %v745 = vadd.f32 %v706, %v715
      %v746 = vadd.f32 %v707, %v715
      %v747 = vadd.f32 %v708, %v715
      %v748 = vadd.f32 %v709, %v715
      %v749 = vmax.f32 %v717, 0.0
      %v750 = vmax.f32 %v718, 0.0
      %v751 = vmax.f32 %v719, 0.0
      %v752 = vmax.f32 %v720, 0.0
      %v753 = vmax.f32 %v721, 0.0
      %v754 = vmax.f32 %v722, 0.0
      %v755 = vmax.f32 %v723, 0.0
      %v756 = vmax.f32 %v724, 0.0
      %v757 = vmax.f32 %v725, 0.0
      %v758 = vmax.f32 %v726, 0.0
      %v759 = vmax.f32 %v727, 0.0
      %v760 = vmax.f32 %v728, 0.0
      %v761 = vmax.f32 %v729, 0.0
      %v762 = vmax.f32 %v730, 0.0
      %v763 = vmax.f32 %v731, 0.0
      %v764 = vmax.f32 %v732, 0.0
      %v765 = vmax.f32 %v733, 0.0
      %v766 = vmax.f32 %v734, 0.0
      %v767 = vmax.f32 %v735, 0.0
      %v768 = vmax.f32 %v736, 0.0
      %v769 = vmax.f32 %v737, 0.0
      %v770 = vmax.f32 %v738, 0.0
      %v771 = vmax.f32 %v739, 0.0
      %v772 = vmax.f32 %v740, 0.0
      %v773 = vmax.f32 %v741, 0.0
      %v774 = vmax.f32 %v742, 0.0
      %v775 = vmax.f32 %v743, 0.0
      %v776 = vmax.f32 %v744, 0.0
      %v777 = vmax.f32 %v745, 0.0
      %v778 = vmax.f32 %v746, 0.0
      %v779 = vmax.f32 %v747, 0.0
      %v780 = vmax.f32 %v748, 0.0
      %v781 = vpack.c.bf16 %v750, %v749
      %v782 = vpack.c.bf16 %v752, %v751
      %v783 = vpack.c.bf16 %v754, %v753
      %v784 = vpack.c.bf16 %v756, %v755
      %v785 = vpack.c.bf16 %v758, %v757
      %v786 = vpack.c.bf16 %v760, %v759
      %v787 = vpack.c.bf16 %v762, %v761
      %v788 = vpack.c.bf16 %v764, %v763
      %v789 = vpack.c.bf16 %v766, %v765
      %v790 = vpack.c.bf16 %v768, %v767
      %v791 = vpack.c.bf16 %v770, %v769
      %v792 = vpack.c.bf16 %v772, %v771
      %v793 = vpack.c.bf16 %v774, %v773
      %v794 = vpack.c.bf16 %v776, %v775
      %v795 = vpack.c.bf16 %v778, %v777
      %v796 = vpack.c.bf16 %v780, %v779
      %v813 = vunpack.c.l.b16 %v781
      %v814 = vunpack.c.h.b16 %v781
      %v815 = vunpack.c.l.b16 %v782
      %v816 = vunpack.c.h.b16 %v782
      %v817 = vunpack.c.l.b16 %v783
      %v818 = vunpack.c.h.b16 %v783
      %v819 = vunpack.c.l.b16 %v784
      %v820 = vunpack.c.h.b16 %v784
      %v821 = vunpack.c.l.b16 %v785
      %v822 = vunpack.c.h.b16 %v785
      %v823 = vunpack.c.l.b16 %v786
      %v824 = vunpack.c.h.b16 %v786
      %v825 = vunpack.c.l.b16 %v787
      %v826 = vunpack.c.h.b16 %v787
      %v827 = vunpack.c.l.b16 %v788
      %v828 = vunpack.c.h.b16 %v788
      %v829 = vunpack.c.l.b16 %v789
      %v830 = vunpack.c.h.b16 %v789
      %v831 = vunpack.c.l.b16 %v790
      %v832 = vunpack.c.h.b16 %v790
      %v833 = vunpack.c.l.b16 %v791
      %v834 = vunpack.c.h.b16 %v791
      %v835 = vunpack.c.l.b16 %v792
      %v836 = vunpack.c.h.b16 %v792
      %v837 = vunpack.c.l.b16 %v793
      %v838 = vunpack.c.h.b16 %v793
      %v839 = vunpack.c.l.b16 %v794
      %v840 = vunpack.c.h.b16 %v794
      %v841 = vunpack.c.l.b16 %v795
      %v842 = vunpack.c.h.b16 %v795
      %v843 = vunpack.c.l.b16 %v796
      %v844 = vunpack.c.h.b16 %v796
      %v845 = vpack.c.b16 %v813, %v813
      %v846 = vpack.c.b16 %v814, %v814
      %v847 = vpack.c.b16 %v815, %v815
      %v848 = vpack.c.b16 %v816, %v816
      %v849 = vpack.c.b16 %v817, %v817
      %v850 = vpack.c.b16 %v818, %v818
      %v851 = vpack.c.b16 %v819, %v819
      %v852 = vpack.c.b16 %v820, %v820
      %v853 = vpack.c.b16 %v821, %v821
      %v854 = vpack.c.b16 %v822, %v822
      %v855 = vpack.c.b16 %v823, %v823
      %v856 = vpack.c.b16 %v824, %v824
      %v857 = vpack.c.b16 %v825, %v825
      %v858 = vpack.c.b16 %v826, %v826
      %v859 = vpack.c.b16 %v827, %v827
      %v860 = vpack.c.b16 %v828, %v828
      %v861 = vpack.c.b16 %v829, %v829
      %v862 = vpack.c.b16 %v830, %v830
      %v863 = vpack.c.b16 %v831, %v831
      %v864 = vpack.c.b16 %v832, %v832
      %v865 = vpack.c.b16 %v833, %v833
      %v866 = vpack.c.b16 %v834, %v834
      %v867 = vpack.c.b16 %v835, %v835
      %v868 = vpack.c.b16 %v836, %v836
      %v869 = vpack.c.b16 %v837, %v837
      %v870 = vpack.c.b16 %v838, %v838
      %v871 = vpack.c.b16 %v839, %v839
      %v872 = vpack.c.b16 %v840, %v840
      %v873 = vpack.c.b16 %v841, %v841
      %v874 = vpack.c.b16 %v842, %v842
      %v875 = vpack.c.b16 %v843, %v843
      %v876 = vpack.c.b16 %v844, %v844
      %909 = vst [vmem:[%s253] sm:$0xf] %v845
      %910 = vst [vmem:[%s253 + $0x4] sm:$0xf] %v846
      %911 = vst [vmem:[%s253 + $0x8] sm:$0xf] %v847
      %912 = vst [vmem:[%s253 + $0xc] sm:$0xf] %v848
      %913 = vst [vmem:[%s253 + $0x10] sm:$0xf] %v849
      %914 = vst [vmem:[%s253 + $0x14] sm:$0xf] %v850
      %915 = vst [vmem:[%s253 + $0x18] sm:$0xf] %v851
      %916 = vst [vmem:[%s253 + $0x1c] sm:$0xf] %v852
      %917 = vst [vmem:[%s253 + $0x20] sm:$0xf] %v853
      %918 = vst [vmem:[%s253 + $0x24] sm:$0xf] %v854
      %919 = vst [vmem:[%s253 + $0x28] sm:$0xf] %v855
      %920 = vst [vmem:[%s253 + $0x2c] sm:$0xf] %v856
      %921 = vst [vmem:[%s253 + $0x30] sm:$0xf] %v857
      %922 = vst [vmem:[%s253 + $0x34] sm:$0xf] %v858
      %923 = vst [vmem:[%s253 + $0x38] sm:$0xf] %v859
      %924 = vst [vmem:[%s253 + $0x3c] sm:$0xf] %v860
      %925 = vst [vmem:[%s253 + $0x40] sm:$0xf] %v861
      %926 = vst [vmem:[%s253 + $0x44] sm:$0xf] %v862
      %927 = vst [vmem:[%s253 + $0x48] sm:$0xf] %v863
      %928 = vst [vmem:[%s253 + $0x4c] sm:$0xf] %v864
      %929 = vst [vmem:[%s253 + $0x50] sm:$0xf] %v865
      %930 = vst [vmem:[%s253 + $0x54] sm:$0xf] %v866
      %931 = vst [vmem:[%s253 + $0x58] sm:$0xf] %v867
      %932 = vst [vmem:[%s253 + $0x5c] sm:$0xf] %v868
      %933 = vst [vmem:[%s253 + $0x60] sm:$0xf] %v869
      %934 = vst [vmem:[%s253 + $0x64] sm:$0xf] %v870
      %935 = vst [vmem:[%s253 + $0x68] sm:$0xf] %v871
      %936 = vst [vmem:[%s253 + $0x6c] sm:$0xf] %v872
      %937 = vst [vmem:[%s253 + $0x70] sm:$0xf] %v873
      %938 = vst [vmem:[%s253 + $0x74] sm:$0xf] %v874
      %939 = vst [vmem:[%s253 + $0x78] sm:$0xf] %v875
      %940 = vst [vmem:[%s253 + $0x7c] sm:$0xf] %v876
      %s941 = smul.u32 32, %s17
      %p942 = scmp.lt.s32.totalorder %s941, 63
      %s943 = scalar_select %p942, %s941, 63
      %s944 = smul.addr %s943, 4
      %s945 = scalar_lea.vmem %s6, %s944
      // Predicated region
      $region45: #{preact_bottleneck_forward.2} parent=43 // pred_check
        %p946 = pneg %p166
      $region46: #{preact_bottleneck_forward.2} parent=43 // pred_check_branch
        %948 = sbr.rel (%p946) target = $region48
      $region47: #{preact_bottleneck_forward.2} parent=43 // pred_region
        %s949 = smul.u32 32, %s17
      $region48: #{preact_bottleneck_forward.2} parent=43 // pred_fallthru
        _
    $region44: #{preact_bottleneck_forward.2} parent=5 // pred_fallthru
      _
    %p950 = scmp.le.s32.totalorder 2, %s12
    // Predicated region
    $region49: #{preact_bottleneck_forward.2} parent=5 // pred_check
      %p951 = pneg %p950
    $region50: #{preact_bottleneck_forward.2} parent=5 // pred_check_branch
      %953 = sbr.rel (%p951) target = $region52
    $region51: #{preact_bottleneck_forward.2} parent=5 // pred_region
      %s954 = ssub.s32 %s12, 2
      // Predicated region
      $region53: #{preact_bottleneck_forward.2} parent=51 // pred_check
        %p955 = pneg %p172
      $region54: #{preact_bottleneck_forward.2} parent=51 // pred_check_branch
        %957 = sbr.rel (%p955) target = $region56
      $region55: #{preact_bottleneck_forward.2} parent=51 // pred_region
        %s958 = smul.u32 32, %s18
        %p959 = scmp.lt.s32.totalorder %s958, 63
        %s960 = scalar_select %p959, %s958, 63
        %s961 = smul.addr %s960, 4
        %s962 = scalar_lea.vmem %s6, %s961
      $region56: #{preact_bottleneck_forward.2} parent=51 // pred_fallthru
        _
    $region52: #{preact_bottleneck_forward.2} parent=5 // pred_fallthru
      _
  $region6: #{preact_bottleneck_forward.2} parent=0 // loop_footer
    %s16 = sadd.s32 1, %s12
  $region7: #{preact_bottleneck_forward.2} parent=0 // loop_footer_branch
    %11 = sbr.rel target = $region3
  $region8: #{preact_bottleneck_forward.2} parent=0 // loop_exit
    _

// kernel: preact_bottleneck_forward.3
$region0: #{preact_bottleneck_forward.3}
  #allocation0 [shape = 'u32[]', space=smem, size = 0x4, offset = 0x4, fixed_abs, tag = 'smem constant byte address 0x4 - core index']
  #allocation1 [shape = 'u32[144,128]{1,0:T(1,128)}', space=vmem, size = 0x12000, scoped, tag = 'internal scratch']
  %s0 = inlined_call_operand.vmem [shape: bf16[2,4,9,9,128], index: 0, kind: input, shape index: {}]
  %s1 = inlined_call_operand.vmem [shape: bf16[1152,128], index: 1, kind: input, shape index: {}]
  %s2 = inlined_call_operand.vmem [shape: f32[1,128], index: 2, kind: input, shape index: {}]
  %s3 = inlined_call_operand.vmem [shape: f32[1,128], index: 3, kind: input, shape index: {}]
  %s4 = inlined_call_operand.vmem [shape: bf16[128,128], index: 4, kind: input, shape index: {}]
  %s5 = inlined_call_operand.vmem [shape: bf16[2,64,128], index: 5, kind: input, shape index: {}]
  %s6 = inlined_call_operand.vmem [shape: f32[1,128], index: 6, kind: input, shape index: {}]
  %s7 = inlined_call_operand.vmem [shape: f32[1,128], index: 7, kind: input, shape index: {}]
  %s8 = inlined_call_operand.vmem [shape: bf16[128,128], index: 8, kind: input, shape index: {}]
  %s9 = inlined_call_operand.vmem [shape: f32[2,64,128], index: 9, kind: output, shape index: {}]
  %s10 = sld [smem:[#allocation0]]
  $region69: #{preact_bottleneck_forward.3} parent=0
    _
  %s12 = ssub.s32 1, %s10
  %s13 = scalar_select 0, %s12, %s10
  loop: start=0, step=1, limit=6
  $region2: #{preact_bottleneck_forward.3} parent=0 // loop_pre_header
    _
  $region3: #{preact_bottleneck_forward.3} parent=0 // loop_header
    %s15 = sphi 0, %s19
    %p16 = scmp.ge.s32.totalorder %s15, 6
    %s22 = sphi 0, %s34
    %s23 = sphi 0, %s30
    %s24 = sphi 0, %s22
    %s25 = sphi 0, %s23
    %s26 = sphi 0, %s24
    %s27 = sphi 0, %s25
    %s37 = sphi 0, %s39
    %s40 = sphi 0, %s37
    %s41 = sphi 0, %s40
    %s57 = sphi 0, %s41
    %s61 = sphi 0, %s61
    %s63 = sphi 0, %s61
    %s64 = sphi 0, %s63
    %s78 = sphi 0, %s64
    %s82 = sphi 0, %s82
    %s84 = sphi 0, %s82
    %s85 = sphi 0, %s84
    %s99 = sphi 0, %s85
    %s103 = sphi 0, %s103
    %s105 = sphi 0, %s103
    %s106 = sphi 0, %s105
    %s120 = sphi 0, %s106
    %s124 = sphi 0, %s124
    %s126 = sphi 0, %s124
    %s127 = sphi 0, %s126
    %s141 = sphi 0, %s127
    %s149 = sphi 0, %s151
    %s152 = sphi 0, %s149
    %s153 = sphi 0, %s152
    %s169 = sphi 0, %s153
    %s173 = sphi 0, %s173
    %s175 = sphi 0, %s173
    %s176 = sphi 0, %s175
    %s190 = sphi 0, %s176
    %s194 = sphi 0, %s194
    %s196 = sphi 0, %s194
    %s197 = sphi 0, %s196
    %s211 = sphi 0, %s197
    %s215 = sphi 0, %s215
    %s217 = sphi 0, %s215
    %s218 = sphi 0, %s217
    %s232 = sphi 0, %s218
    %s240 = sphi 0, %s242
    %s243 = sphi 0, %s240
    %s244 = sphi 0, %s243
    %s260 = sphi 0, %s244
  $region4: #{preact_bottleneck_forward.3} parent=0 // loop_header_branch
    %18 = sbr.rel (%p16) target = $region8
  $region5: #{preact_bottleneck_forward.3} parent=0 // loop_body
    %s20 = ssub.s32 %s15, 1
    %s21 = ssub.s32 %s15, 2
    %s28 = sadd.s32 1, %s23
    %p29 = scmp.ge.s32.totalorder %s28, 2
    %s30 = scalar_select %p29, 0, %s28
    %s31 = sadd.s32 1, %s22
    %s32 = scalar_select %p29, %s31, %s22
    %p33 = scmp.ge.s32.totalorder %s32, 2
    %s34 = scalar_select %p33, 0, %s32
    %s35 = ssub.s32 %s22, %s34
    %p36 = scmp.eq.s32.totalorder %s35, 0
    %s38 = sadd.s32 %s37, 1
    %s39 = scalar_select %p36, %s37, %s38
    %p42 = pneg %p36
    %p43 = scmp.eq.s32.totalorder %s15, 3
    %p44 = por %p42, %p43
    %p45 = scmp.ne.s32.totalorder %s37, %s40
    %p46 = scmp.eq.s32.totalorder %s15, 0
    %p47 = por %p45, %p46
    %p48 = scmp.ne.s32.totalorder %s37, %s40
    %p49 = scmp.eq.s32.totalorder %s20, 3
    %p50 = por %p48, %p49
    %p51 = scmp.ne.s32.totalorder %s40, %s41
    %p52 = scmp.eq.s32.totalorder %s20, 0
    %p53 = por %p51, %p52
    %p54 = scmp.ne.s32.totalorder %s40, %s41
    %p55 = scmp.eq.s32.totalorder %s21, 3
    %p56 = por %p54, %p55
    %p58 = scmp.ne.s32.totalorder %s41, %s57
    %p59 = scmp.eq.s32.totalorder %s21, 0
    %p60 = por %p58, %p59
    %s62 = sadd.s32 %s61, 1
    %p65 = scmp.eq.s32.totalorder %s15, 3
    %p66 = scmp.ne.s32.totalorder %s61, %s63
    %p67 = scmp.eq.s32.totalorder %s15, 0
    %p68 = por %p66, %p67
    %p69 = scmp.ne.s32.totalorder %s61, %s63
    %p70 = scmp.eq.s32.totalorder %s20, 3
    %p71 = por %p69, %p70
    %p72 = scmp.ne.s32.totalorder %s63, %s64
    %p73 = scmp.eq.s32.totalorder %s20, 0
    %p74 = por %p72, %p73
    %p75 = scmp.ne.s32.totalorder %s63, %s64
    %p76 = scmp.eq.s32.totalorder %s21, 3
    %p77 = por %p75, %p76
    %p79 = scmp.ne.s32.totalorder %s64, %s78
    %p80 = scmp.eq.s32.totalorder %s21, 0
    %p81 = por %p79, %p80
    %s83 = sadd.s32 %s82, 1
    %p86 = scmp.eq.s32.totalorder %s15, 3
    %p87 = scmp.ne.s32.totalorder %s82, %s84
    %p88 = scmp.eq.s32.totalorder %s15, 0
    %p89 = por %p87, %p88
    %p90 = scmp.ne.s32.totalorder %s82, %s84
    %p91 = scmp.eq.s32.totalorder %s20, 3
    %p92 = por %p90, %p91
    %p93 = scmp.ne.s32.totalorder %s84, %s85
    %p94 = scmp.eq.s32.totalorder %s20, 0
    %p95 = por %p93, %p94
    %p96 = scmp.ne.s32.totalorder %s84, %s85
    %p97 = scmp.eq.s32.totalorder %s21, 3
    %p98 = por %p96, %p97
    %p100 = scmp.ne.s32.totalorder %s85, %s99
    %p101 = scmp.eq.s32.totalorder %s21, 0
    %p102 = por %p100, %p101
    %s104 = sadd.s32 %s103, 1
    %p107 = scmp.eq.s32.totalorder %s15, 3
    %p108 = scmp.ne.s32.totalorder %s103, %s105
    %p109 = scmp.eq.s32.totalorder %s15, 0
    %p110 = por %p108, %p109
    %p111 = scmp.ne.s32.totalorder %s103, %s105
    %p112 = scmp.eq.s32.totalorder %s20, 3
    %p113 = por %p111, %p112
    %p114 = scmp.ne.s32.totalorder %s105, %s106
    %p115 = scmp.eq.s32.totalorder %s20, 0
    %p116 = por %p114, %p115
    %p117 = scmp.ne.s32.totalorder %s105, %s106
    %p118 = scmp.eq.s32.totalorder %s21, 3
    %p119 = por %p117, %p118
    %p121 = scmp.ne.s32.totalorder %s106, %s120
    %p122 = scmp.eq.s32.totalorder %s21, 0
    %p123 = por %p121, %p122
    %s125 = sadd.s32 %s124, 1
    %p128 = scmp.eq.s32.totalorder %s15, 3
    %p129 = scmp.ne.s32.totalorder %s124, %s126
    %p130 = scmp.eq.s32.totalorder %s15, 0
    %p131 = por %p129, %p130
    %p132 = scmp.ne.s32.totalorder %s124, %s126
    %p133 = scmp.eq.s32.totalorder %s20, 3
    %p134 = por %p132, %p133
    %p135 = scmp.ne.s32.totalorder %s126, %s127
    %p136 = scmp.eq.s32.totalorder %s20, 0
    %p137 = por %p135, %p136
    %p138 = scmp.ne.s32.totalorder %s126, %s127
    %p139 = scmp.eq.s32.totalorder %s21, 3
    %p140 = por %p138, %p139
    %p142 = scmp.ne.s32.totalorder %s127, %s141
    %p143 = scmp.eq.s32.totalorder %s21, 0
    %p144 = por %p142, %p143
    %s145 = ssub.s32 %s22, %s34
    %s146 = ssub.s32 %s23, %s30
    %s147 = sor.u32 %s145, %s146
    %p148 = scmp.eq.s32.totalorder %s147, 0
    %s150 = sadd.s32 %s149, 1
    %s151 = scalar_select %p148, %s149, %s150
    %p154 = pneg %p148
    %p155 = scmp.eq.s32.totalorder %s15, 3
    %p156 = por %p154, %p155
    %p157 = scmp.ne.s32.totalorder %s149, %s152
    %p158 = scmp.eq.s32.totalorder %s15, 0
    %p159 = por %p157, %p158
    %p160 = scmp.ne.s32.totalorder %s149, %s152
    %p161 = scmp.eq.s32.totalorder %s20, 3
    %p162 = por %p160, %p161
    %p163 = scmp.ne.s32.totalorder %s152, %s153
    %p164 = scmp.eq.s32.totalorder %s20, 0
    %p165 = por %p163, %p164
    %p166 = scmp.ne.s32.totalorder %s152, %s153
    %p167 = scmp.eq.s32.totalorder %s21, 3
    %p168 = por %p166, %p167
    %p170 = scmp.ne.s32.totalorder %s153, %s169
    %p171 = scmp.eq.s32.totalorder %s21, 0
    %p172 = por %p170, %p171
    %s174 = sadd.s32 %s173, 1
    %p177 = scmp.eq.s32.totalorder %s15, 3
    %p178 = scmp.ne.s32.totalorder %s173, %s175
    %p179 = scmp.eq.s32.totalorder %s15, 0
    %p180 = por %p178, %p179
    %p181 = scmp.ne.s32.totalorder %s173, %s175
    %p182 = scmp.eq.s32.totalorder %s20, 3
    %p183 = por %p181, %p182
    %p184 = scmp.ne.s32.totalorder %s175, %s176
    %p185 = scmp.eq.s32.totalorder %s20, 0
    %p186 = por %p184, %p185
    %p187 = scmp.ne.s32.totalorder %s175, %s176
    %p188 = scmp.eq.s32.totalorder %s21, 3
    %p189 = por %p187, %p188
    %p191 = scmp.ne.s32.totalorder %s176, %s190
    %p192 = scmp.eq.s32.totalorder %s21, 0
    %p193 = por %p191, %p192
    %s195 = sadd.s32 %s194, 1
    %p198 = scmp.eq.s32.totalorder %s15, 3
    %p199 = scmp.ne.s32.totalorder %s194, %s196
    %p200 = scmp.eq.s32.totalorder %s15, 0
    %p201 = por %p199, %p200
    %p202 = scmp.ne.s32.totalorder %s194, %s196
    %p203 = scmp.eq.s32.totalorder %s20, 3
    %p204 = por %p202, %p203
    %p205 = scmp.ne.s32.totalorder %s196, %s197
    %p206 = scmp.eq.s32.totalorder %s20, 0
    %p207 = por %p205, %p206
    %p208 = scmp.ne.s32.totalorder %s196, %s197
    %p209 = scmp.eq.s32.totalorder %s21, 3
    %p210 = por %p208, %p209
    %p212 = scmp.ne.s32.totalorder %s197, %s211
    %p213 = scmp.eq.s32.totalorder %s21, 0
    %p214 = por %p212, %p213
    %s216 = sadd.s32 %s215, 1
    %p219 = scmp.eq.s32.totalorder %s15, 3
    %p220 = scmp.ne.s32.totalorder %s215, %s217
    %p221 = scmp.eq.s32.totalorder %s15, 0
    %p222 = por %p220, %p221
    %p223 = scmp.ne.s32.totalorder %s215, %s217
    %p224 = scmp.eq.s32.totalorder %s20, 3
    %p225 = por %p223, %p224
    %p226 = scmp.ne.s32.totalorder %s217, %s218
    %p227 = scmp.eq.s32.totalorder %s20, 0
    %p228 = por %p226, %p227
    %p229 = scmp.ne.s32.totalorder %s217, %s218
    %p230 = scmp.eq.s32.totalorder %s21, 3
    %p231 = por %p229, %p230
    %p233 = scmp.ne.s32.totalorder %s218, %s232
    %p234 = scmp.eq.s32.totalorder %s21, 0
    %p235 = por %p233, %p234
    %s236 = ssub.s32 %s22, %s34
    %s237 = ssub.s32 %s23, %s30
    %s238 = sor.u32 %s236, %s237
    %p239 = scmp.eq.s32.totalorder %s238, 0
    %s241 = sadd.s32 %s240, 1
    %s242 = scalar_select %p239, %s240, %s241
    %p245 = pneg %p239
    %p246 = scmp.eq.s32.totalorder %s15, 3
    %p247 = por %p245, %p246
    %p248 = scmp.ne.s32.totalorder %s240, %s243
    %p249 = scmp.eq.s32.totalorder %s15, 0
    %p250 = por %p248, %p249
    %p251 = scmp.ne.s32.totalorder %s240, %s243
    %p252 = scmp.eq.s32.totalorder %s20, 3
    %p253 = por %p251, %p252
    %p254 = scmp.ne.s32.totalorder %s243, %s244
    %p255 = scmp.eq.s32.totalorder %s20, 0
    %p256 = por %p254, %p255
    %p257 = scmp.ne.s32.totalorder %s243, %s244
    %p258 = scmp.eq.s32.totalorder %s21, 3
    %p259 = por %p257, %p258
    %p261 = scmp.ne.s32.totalorder %s244, %s260
    %p262 = scmp.eq.s32.totalorder %s21, 0
    %p263 = por %p261, %p262
    %p264 = scmp.le.s32.totalorder 1, %s15
    %p265 = scmp.lt.s32.totalorder %s15, 5
    %p266 = pnand %p264, %p265
    %p267 = pneg %p266
    // Predicated region
    $region9: #{preact_bottleneck_forward.3} parent=5 // pred_check
      _
    $region10: #{preact_bottleneck_forward.3} parent=5 // pred_check_branch
      %269 = sbr.rel (%p266) target = $region12
    $region11: #{preact_bottleneck_forward.3} parent=5 // pred_region
      %s270 = ssub.s32 %s15, 1
      // Predicated region
      $region13: #{preact_bottleneck_forward.3} parent=11 // pred_check
        %p271 = pneg %p74
      $region14: #{preact_bottleneck_forward.3} parent=11 // pred_check_branch
        %273 = sbr.rel (%p271) target = $region16
      $region15: #{preact_bottleneck_forward.3} parent=11 // pred_region
        _
      $region16: #{preact_bottleneck_forward.3} parent=11 // pred_fallthru
        _
      // Predicated region
      $region17: #{preact_bottleneck_forward.3} parent=11 // pred_check
        %p274 = pneg %p95
      $region18: #{preact_bottleneck_forward.3} parent=11 // pred_check_branch
        %276 = sbr.rel (%p274) target = $region20
      $region19: #{preact_bottleneck_forward.3} parent=11 // pred_region
        _
      $region20: #{preact_bottleneck_forward.3} parent=11 // pred_fallthru
        _
      // Predicated region
      $region21: #{preact_bottleneck_forward.3} parent=11 // pred_check
        %p277 = pneg %p116
      $region22: #{preact_bottleneck_forward.3} parent=11 // pred_check_branch
        %279 = sbr.rel (%p277) target = $region24
      $region23: #{preact_bottleneck_forward.3} parent=11 // pred_region
        _
      $region24: #{preact_bottleneck_forward.3} parent=11 // pred_fallthru
        _
      // Predicated region
      $region25: #{preact_bottleneck_forward.3} parent=11 // pred_check
        %p280 = pneg %p137
      $region26: #{preact_bottleneck_forward.3} parent=11 // pred_check_branch
        %282 = sbr.rel (%p280) target = $region28
      $region27: #{preact_bottleneck_forward.3} parent=11 // pred_region
        _
      $region28: #{preact_bottleneck_forward.3} parent=11 // pred_fallthru
        _
      // Predicated region
      $region29: #{preact_bottleneck_forward.3} parent=11 // pred_check
        %p283 = pneg %p186
      $region30: #{preact_bottleneck_forward.3} parent=11 // pred_check_branch
        %285 = sbr.rel (%p283) target = $region32
      $region31: #{preact_bottleneck_forward.3} parent=11 // pred_region
        _
      $region32: #{preact_bottleneck_forward.3} parent=11 // pred_fallthru
        _
      // Predicated region
      $region33: #{preact_bottleneck_forward.3} parent=11 // pred_check
        %p286 = pneg %p207
      $region34: #{preact_bottleneck_forward.3} parent=11 // pred_check_branch
        %288 = sbr.rel (%p286) target = $region36
      $region35: #{preact_bottleneck_forward.3} parent=11 // pred_region
        _
      $region36: #{preact_bottleneck_forward.3} parent=11 // pred_fallthru
        _
      // Predicated region
      $region37: #{preact_bottleneck_forward.3} parent=11 // pred_check
        %p289 = pneg %p228
      $region38: #{preact_bottleneck_forward.3} parent=11 // pred_check_branch
        %291 = sbr.rel (%p289) target = $region40
      $region39: #{preact_bottleneck_forward.3} parent=11 // pred_region
        _
      $region40: #{preact_bottleneck_forward.3} parent=11 // pred_fallthru
        _
    $region12: #{preact_bottleneck_forward.3} parent=5 // pred_fallthru
      _
    %p292 = scmp.lt.s32.totalorder %s15, 4
    // Predicated region
    $region41: #{preact_bottleneck_forward.3} parent=5 // pred_check
      %p293 = pneg %p292
    $region42: #{preact_bottleneck_forward.3} parent=5 // pred_check_branch
      %295 = sbr.rel (%p293) target = $region44
    $region43: #{preact_bottleneck_forward.3} parent=5 // pred_region
      // Predicated region
      $region45: #{preact_bottleneck_forward.3} parent=43 // pred_check
        %p296 = pneg %p47
      $region46: #{preact_bottleneck_forward.3} parent=43 // pred_check_branch
        %298 = sbr.rel (%p296) target = $region48
      $region47: #{preact_bottleneck_forward.3} parent=43 // pred_region
        %p299 = scmp.lt.s32.totalorder %s22, 1
        %s300 = scalar_select %p299, %s22, 1
        %s301 = smul.addr %s300, 72
        %s302 = smul.addr %s301, 4
        %s303 = scalar_lea.vmem %s0, %s302
      $region48: #{preact_bottleneck_forward.3} parent=43 // pred_fallthru
        _
      // Predicated region
      $region49: #{preact_bottleneck_forward.3} parent=43 // pred_check
        %p304 = pneg %p159
      $region50: #{preact_bottleneck_forward.3} parent=43 // pred_check_branch
        %306 = sbr.rel (%p304) target = $region52
      $region51: #{preact_bottleneck_forward.3} parent=43 // pred_region
        %s307 = smul.u32 4, %s23
        %p308 = scmp.lt.s32.totalorder %s22, 1
        %s309 = scalar_select %p308, %s22, 1
        %p310 = scmp.lt.s32.totalorder %s307, 7
        %s311 = scalar_select %p310, %s307, 7
        %s312 = smul.addr %s309, 8
        %s313 = sadd.s32 %s311, %s312
        %s314 = smul.addr %s313, 4
        %s315 = scalar_lea.vmem %s5, %s314
        %s316 = smul.u32 4, %s23
      $region52: #{preact_bottleneck_forward.3} parent=43 // pred_fallthru
        _
    $region44: #{preact_bottleneck_forward.3} parent=5 // pred_fallthru
      _
    %p317 = scmp.le.s32.totalorder 1, %s15
    %p318 = scmp.lt.s32.totalorder %s15, 5
    %p319 = pnand %p317, %p318
    %p320 = pneg %p319
    // Predicated region
    $region53: #{preact_bottleneck_forward.3} parent=5 // pred_check
      _
    $region54: #{preact_bottleneck_forward.3} parent=5 // pred_check_branch
      %322 = sbr.rel (%p319) target = $region56
    $region55: #{preact_bottleneck_forward.3} parent=5 // pred_region
      %s323 = ssub.s32 %s15, 1
      %p324 = scmp.lt.s32.totalorder %s24, 1
      %s325 = scalar_select %p324, %s24, 1
      %s326 = smul.addr %s325, 72
      %s327 = smul.addr %s326, 4
      %s328 = scalar_lea.vmem %s0, %s327
      %p329 = pneg %p53
      %p330 = pneg %p50
      %p331 = pneg %p74
      %p332 = pneg %p71
      %p333 = pneg %p95
      %p334 = pneg %p92
      %p335 = pneg %p116
      %p336 = pneg %p113
      %p337 = pneg %p137
      %p338 = pneg %p134
      %s339 = smul.u32 4, %s25
      %p340 = scmp.lt.s32.totalorder %s24, 1
      %s341 = scalar_select %p340, %s24, 1
      %p342 = scmp.lt.s32.totalorder %s339, 7
      %s343 = scalar_select %p342, %s339, 7
      %s344 = smul.addr %s341, 8
      %s345 = sadd.s32 %s343, %s344
      %s346 = smul.addr %s345, 4
      %s347 = scalar_lea.vmem %s5, %s346
      %p348 = pneg %p165
      %p349 = pneg %p162
      %p350 = pneg %p186
      %p351 = pneg %p183
      %p352 = pneg %p207
      %p353 = pneg %p204
      %p354 = pneg %p228
      %p355 = pneg %p225
      %p356 = pneg %p256
      %p357 = pneg %p253
      %s358 = smul.u32 4, %s25
      %p359 = scmp.lt.s32.totalorder %s24, 1
      %s360 = scalar_select %p359, %s24, 1
      %p361 = scmp.lt.s32.totalorder %s358, 7
      %s362 = scalar_select %p361, %s358, 7
      %s363 = smul.addr %s360, 8
      %s364 = sadd.s32 %s362, %s363
      %s365 = smul.addr %s364, 8
      %s366 = scalar_lea.vmem %s9, %s365
      %p367 = scmp.lt.s32.totalorder %s24, 1
      %s368 = scalar_select %p367, %s24, 1
      %s369 = smul.addr %s368, 72
      %s370 = smul.addr %s369, 4
      %s371 = scalar_lea.vmem %s0, %s370
      %s372 = smul.u32 4, %s25
      %p373 = scmp.lt.s32.totalorder %s24, 1
      %s374 = scalar_select %p373, %s24, 1
      %p375 = scmp.lt.s32.totalorder %s372, 7
      %s376 = scalar_select %p375, %s372, 7
      %s377 = smul.addr %s374, 8
      %s378 = sadd.s32 %s376, %s377
      %s379 = smul.addr %s378, 4
      %s380 = scalar_lea.vmem %s5, %s379
      %s381 = smul.u32 4, %s25
      %s382 = smul.u32 4, %s25
      %p383 = scmp.lt.s32.totalorder %s24, 1
      %s384 = scalar_select %p383, %s24, 1
      %p385 = scmp.lt.s32.totalorder %s382, 7
      %s386 = scalar_select %p385, %s382, 7
      %s387 = smul.addr %s384, 8
      %s388 = sadd.s32 %s386, %s387
      %s389 = smul.addr %s388, 8
      %s390 = scalar_lea.vmem %s9, %s389
      %s391 = smul.u32 4, %s25
      %s393 = smul.u32 %s25, 4
      %s394 = smul.u32 %s393, 2
      %s395 = smul.addr %s394, 4
      %s396 = scalar_lea.vmem %s371, %s395
      %v397 = vld [vmem:[%s396] sm:$0xf]
      %v398 = vld [vmem:[%s396 + $0x4] sm:$0x1]
      %v399 = vld [vmem:[%s396 + $0x8] sm:$0xf]
      %v400 = vld [vmem:[%s396 + $0xc] sm:$0x1]
      %v401 = vld [vmem:[%s396 + $0x10] sm:$0xf]
      %v402 = vld [vmem:[%s396 + $0x14] sm:$0x1]
      %v403 = vld [vmem:[%s396 + $0x18] sm:$0xf]
      %v404 = vld [vmem:[%s396 + $0x1c] sm:$0x1]
      %v405 = vld [vmem:[%s396 + $0x20] sm:$0xf]
      %v406 = vld [vmem:[%s396 + $0x24] sm:$0x1]
      %s407 = sadd.s32 %s394, 18
      %s408 = smul.addr %s407, 4
      %s409 = scalar_lea.vmem %s371, %s408
      %v410 = vld [vmem:[%s409] sm:$0xf]
      %v411 = vld [vmem:[%s409 + $0x8] sm:$0xf]
      %v412 = vld [vmem:[%s409 + $0x10] sm:$0xf]
      %v413 = vld [vmem:[%s409 + $0x18] sm:$0xf]
      %v414 = vld [vmem:[%s409 + $0x20] sm:$0xf]
      %vm415 = vsmask.f32 3328
      %vm416 = vsmask.f32 7440
      %vm417 = vmor %vm415, %vm416
      %v419 = vshrl.u32 %v397, 16
      %v421 = vrot.slane %v419, 4
      %v422 = vshll.u32 %v397, 16
      %v424 = vrot.slane %v422, 5
      %v425 = vor.u32 %v421, %v424
      %v426 = vrot.slane %v425, 4
      %v428 = vshll.u32 %v398, 16
      %v430 = vrot.slane %v428, 5
      %v431 = vsel %vm417, %v426, %v430
      %v433 = vshrl.u32 %v399, 16
      %v435 = vrot.slane %v433, 4
      %v436 = vshll.u32 %v399, 16
      %v438 = vrot.slane %v436, 5
      %v439 = vor.u32 %v435, %v438
      %v440 = vrot.slane %v439, 4
      %v442 = vshll.u32 %v400, 16
      %v444 = vrot.slane %v442, 5
      %v445 = vsel %vm417, %v440, %v444
      %v447 = vshrl.u32 %v401, 16
      %v449 = vrot.slane %v447, 4
      %v450 = vshll.u32 %v401, 16
      %v452 = vrot.slane %v450, 5
      %v453 = vor.u32 %v449, %v452
      %v454 = vrot.slane %v453, 4
      %v456 = vshll.u32 %v402, 16
      %v458 = vrot.slane %v456, 5
      %v459 = vsel %vm417, %v454, %v458
      %v461 = vshrl.u32 %v403, 16
      %v463 = vrot.slane %v461, 4
      %v464 = vshll.u32 %v403, 16
      %v466 = vrot.slane %v464, 5
      %v467 = vor.u32 %v463, %v466
      %v468 = vrot.slane %v467, 4
      %v470 = vshll.u32 %v404, 16
      %v472 = vrot.slane %v470, 5
      %v473 = vsel %vm417, %v468, %v472
      %s474 = sadd.s32 %s394, 36
      %s475 = smul.addr %s474, 4
      %s476 = scalar_lea.vmem %s371, %s475
      %v477 = vld [vmem:[%s476] sm:$0xf]
      %v478 = vld [vmem:[%s476 + $0x4] sm:$0x1]
      %v479 = vld [vmem:[%s476 + $0x8] sm:$0xf]
      %v480 = vld [vmem:[%s476 + $0xc] sm:$0x1]
      %v481 = vld [vmem:[%s476 + $0x10] sm:$0xf]
      %v482 = vld [vmem:[%s476 + $0x14] sm:$0x1]
      %v483 = vld [vmem:[%s476 + $0x18] sm:$0xf]
      %v484 = vld [vmem:[%s476 + $0x1c] sm:$0x1]
      %s485 = sadd.s32 %s394, 54
      %s486 = smul.addr %s485, 4
      %s487 = scalar_lea.vmem %s371, %s486
      %v488 = vld [vmem:[%s487] sm:$0xf]
      %v489 = vld [vmem:[%s487 + $0x8] sm:$0xf]
      %v490 = vld [vmem:[%s487 + $0x10] sm:$0xf]
      %v491 = vld [vmem:[%s487 + $0x18] sm:$0xf]
      %v493 = vshrl.u32 %v477, 16
      %v495 = vrot.slane %v493, 4
      %v496 = vshll.u32 %v477, 16
      %v498 = vrot.slane %v496, 5
      %v499 = vor.u32 %v495, %v498
      %v500 = vrot.slane %v499, 4
      %v502 = vshll.u32 %v478, 16
      %v504 = vrot.slane %v502, 5
      %v505 = vsel %vm417, %v500, %v504
      %v507 = vshrl.u32 %v479, 16
      %v509 = vrot.slane %v507, 4
      %v510 = vshll.u32 %v479, 16
      %v512 = vrot.slane %v510, 5
      %v513 = vor.u32 %v509, %v512
      %v514 = vrot.slane %v513, 4
      %v516 = vshll.u32 %v480, 16
      %v518 = vrot.slane %v516, 5
      %v519 = vsel %vm417, %v514, %v518
      %v521 = vshrl.u32 %v481, 16
      %v523 = vrot.slane %v521, 4
      %v524 = vshll.u32 %v481, 16
      %v526 = vrot.slane %v524, 5
      %v527 = vor.u32 %v523, %v526
      %v528 = vrot.slane %v527, 4
      %v530 = vshll.u32 %v482, 16
      %v532 = vrot.slane %v530, 5
      %v533 = vsel %vm417, %v528, %v532
      %v535 = vshrl.u32 %v483, 16
      %v537 = vrot.slane %v535, 4
      %v538 = vshll.u32 %v483, 16
      %v540 = vrot.slane %v538, 5
      %v541 = vor.u32 %v537, %v540
      %v542 = vrot.slane %v541, 4
      %v544 = vshll.u32 %v484, 16
      %v546 = vrot.slane %v544, 5
      %v547 = vsel %vm417, %v542, %v546
      %v549 = vshrl.u32 %v405, 16
      %v551 = vrot.slane %v549, 4
      %v552 = vshll.u32 %v405, 16
      %v554 = vrot.slane %v552, 5
      %v555 = vor.u32 %v551, %v554
      %v556 = vrot.slane %v555, 4
      %v558 = vshll.u32 %v406, 16
      %v560 = vrot.slane %v558, 5
      %v561 = vsel %vm417, %v556, %v560
      %v566 = vunpack.c.l.b16 %v397
      %v567 = vunpack.c.l.b16 %v399
      %v568 = vunpack.c.l.b16 %v401
      %v569 = vunpack.c.l.b16 %v403
      %v570 = vpack.c.b16 %v567, %v566
      %v571 = vpack.c.b16 %v569, %v568
      %v578 = vunpack.c.l.b16 %v410
      %v579 = vunpack.c.l.b16 %v411
      %v580 = vunpack.c.l.b16 %v412
      %v581 = vunpack.c.l.b16 %v413
      %v582 = vpack.c.b16 %v579, %v578
      %v583 = vpack.c.b16 %v581, %v580
      %v586 = vunpack.c.l.b16 %v431
      %v587 = vunpack.c.l.b16 %v445
      %v588 = vunpack.c.l.b16 %v459
      %v589 = vunpack.c.l.b16 %v473
      %v590 = vpack.c.b16 %v587, %v586
      %v591 = vpack.c.b16 %v589, %v588
      %v598 = vunpack.c.l.b16 %v477
      %v599 = vunpack.c.l.b16 %v479
      %v600 = vunpack.c.l.b16 %v481
      %v601 = vunpack.c.l.b16 %v483
      %v602 = vpack.c.b16 %v599, %v598
      %v603 = vpack.c.b16 %v601, %v600
      %v610 = vunpack.c.l.b16 %v488
      %v611 = vunpack.c.l.b16 %v489
      %v612 = vunpack.c.l.b16 %v490
      %v613 = vunpack.c.l.b16 %v491
      %v614 = vpack.c.b16 %v611, %v610
      %v615 = vpack.c.b16 %v613, %v612
      %v618 = vunpack.c.l.b16 %v505
      %v619 = vunpack.c.l.b16 %v519
      %v620 = vunpack.c.l.b16 %v533
      %v621 = vunpack.c.l.b16 %v547
      %v622 = vpack.c.b16 %v619, %v618
      %v623 = vpack.c.b16 %v621, %v620
      %v627 = vunpack.c.l.b16 %v405
      %v628 = vpack.c.b16 %v568, %v567
      %v629 = vpack.c.b16 %v627, %v569
      %v633 = vunpack.c.l.b16 %v414
      %v634 = vpack.c.b16 %v580, %v579
      %v635 = vpack.c.b16 %v633, %v581
      %v638 = vunpack.c.l.b16 %v561
      %v639 = vpack.c.b16 %v588, %v587
      %v640 = vpack.c.b16 %v638, %v589
      %v643 = vld [vmem:[%s1] sm:$0xf]
      %v644 = vld [vmem:[%s1 + $0x4] sm:$0xf]
      %v645 = vld [vmem:[%s1 + $0x8] sm:$0xf]
      %v646 = vld [vmem:[%s1 + $0xc] sm:$0xf]
      %v647 = vld [vmem:[%s1 + $0x10] sm:$0xf]
      %v648 = vld [vmem:[%s1 + $0x14] sm:$0xf]
      %v649 = vld [vmem:[%s1 + $0x18] sm:$0xf]
      %v650 = vld [vmem:[%s1 + $0x1c] sm:$0xf]
      %v651 = vld [vmem:[%s1 + $0x20] sm:$0xf]
      %v652 = vld [vmem:[%s1 + $0x24] sm:$0xf]
      %v653 = vld [vmem:[%s1 + $0x28] sm:$0xf]
      %v654 = vld [vmem:[%s1 + $0x2c] sm:$0xf]
      %v655 = vld [vmem:[%s1 + $0x30] sm:$0xf]
      %v656 = vld [vmem:[%s1 + $0x34] sm:$0xf]
      %v657 = vld [vmem:[%s1 + $0x38] sm:$0xf]
      %v658 = vld [vmem:[%s1 + $0x3c] sm:$0xf]
      %v659 = vld [vmem:[%s1 + $0x40] sm:$0xf]
      %v660 = vld [vmem:[%s1 + $0x44] sm:$0xf]
      %v661 = vld [vmem:[%s1 + $0x48] sm:$0xf]
      %v662 = vld [vmem:[%s1 + $0x4c] sm:$0xf]
      %v663 = vld [vmem:[%s1 + $0x50] sm:$0xf]
      %v664 = vld [vmem:[%s1 + $0x54] sm:$0xf]
      %v665 = vld [vmem:[%s1 + $0x58] sm:$0xf]
      %v666 = vld [vmem:[%s1 + $0x5c] sm:$0xf]
      %v667 = vld [vmem:[%s1 + $0x60] sm:$0xf]
      %v668 = vld [vmem:[%s1 + $0x64] sm:$0xf]
      %v669 = vld [vmem:[%s1 + $0x68] sm:$0xf]
      %v670 = vld [vmem:[%s1 + $0x6c] sm:$0xf]
      %v671 = vld [vmem:[%s1 + $0x70] sm:$0xf]
      %v672 = vld [vmem:[%s1 + $0x74] sm:$0xf]
      %v673 = vld [vmem:[%s1 + $0x78] sm:$0xf]
      %v674 = vld [vmem:[%s1 + $0x7c] sm:$0xf]
      %v675 = vld [vmem:[%s1 + $0x80] sm:$0xf]
      %v676 = vld [vmem:[%s1 + $0x84] sm:$0xf]
      %v677 = vld [vmem:[%s1 + $0x88] sm:$0xf]
      %v678 = vld [vmem:[%s1 + $0x8c] sm:$0xf]
      %v679 = vld [vmem:[%s1 + $0x90] sm:$0xf]
      %v680 = vld [vmem:[%s1 + $0x94] sm:$0xf]
      %v681 = vld [vmem:[%s1 + $0x98] sm:$0xf]
      %v682 = vld [vmem:[%s1 + $0x9c] sm:$0xf]
      %v683 = vld [vmem:[%s1 + $0xa0] sm:$0xf]
      %v684 = vld [vmem:[%s1 + $0xa4] sm:$0xf]
      %v685 = vld [vmem:[%s1 + $0xa8] sm:$0xf]
      %v686 = vld [vmem:[%s1 + $0xac] sm:$0xf]
      %v687 = vld [vmem:[%s1 + $0xb0] sm:$0xf]
      %v688 = vld [vmem:[%s1 + $0xb4] sm:$0xf]
      %v689 = vld [vmem:[%s1 + $0xb8] sm:$0xf]
      %v690 = vld [vmem:[%s1 + $0xbc] sm:$0xf]
      %v691 = vld [vmem:[%s1 + $0xc0] sm:$0xf]
      %v692 = vld [vmem:[%s1 + $0xc4] sm:$0xf]
      %v693 = vld [vmem:[%s1 + $0xc8] sm:$0xf]
      %v694 = vld [vmem:[%s1 + $0xcc] sm:$0xf]
      %v695 = vld [vmem:[%s1 + $0xd0] sm:$0xf]
      %v696 = vld [vmem:[%s1 + $0xd4] sm:$0xf]
      %v697 = vld [vmem:[%s1 + $0xd8] sm:$0xf]
      %v698 = vld [vmem:[%s1 + $0xdc] sm:$0xf]
      %v699 = vld [vmem:[%s1 + $0xe0] sm:$0xf]
      %v700 = vld [vmem:[%s1 + $0xe4] sm:$0xf]
      %v701 = vld [vmem:[%s1 + $0xe8] sm:$0xf]
      %v702 = vld [vmem:[%s1 + $0xec] sm:$0xf]
      %v703 = vld [vmem:[%s1 + $0xf0] sm:$0xf]
      %v704 = vld [vmem:[%s1 + $0xf4] sm:$0xf]
      %v705 = vld [vmem:[%s1 + $0xf8] sm:$0xf]
      %v706 = vld [vmem:[%s1 + $0xfc] sm:$0xf]
      %v707 = vld [vmem:[%s1 + $0x100] sm:$0xf]
      %v708 = vld [vmem:[%s1 + $0x104] sm:$0xf]
      %v709 = vld [vmem:[%s1 + $0x108] sm:$0xf]
      %v710 = vld [vmem:[%s1 + $0x10c] sm:$0xf]
      %v711 = vld [vmem:[%s1 + $0x110] sm:$0xf]
      %v712 = vld [vmem:[%s1 + $0x114] sm:$0xf]
      %v713 = vld [vmem:[%s1 + $0x118] sm:$0xf]
      %v714 = vld [vmem:[%s1 + $0x11c] sm:$0xf]
      %v715 = vld [vmem:[%s1 + $0x120] sm:$0xf]
      %v716 = vld [vmem:[%s1 + $0x124] sm:$0xf]
      %v717 = vld [vmem:[%s1 + $0x128] sm:$0xf]
      %v718 = vld [vmem:[%s1 + $0x12c] sm:$0xf]
      %v719 = vld [vmem:[%s1 + $0x130] sm:$0xf]
      %v720 = vld [vmem:[%s1 + $0x134] sm:$0xf]
      %v721 = vld [vmem:[%s1 + $0x138] sm:$0xf]
      %v722 = vld [vmem:[%s1 + $0x13c] sm:$0xf]
      %v723 = vld [vmem:[%s1 + $0x140] sm:$0xf]
      %v724 = vld [vmem:[%s1 + $0x144] sm:$0xf]
      %v725 = vld [vmem:[%s1 + $0x148] sm:$0xf]
      %v726 = vld [vmem:[%s1 + $0x14c] sm:$0xf]
      %v727 = vld [vmem:[%s1 + $0x150] sm:$0xf]
      %v728 = vld [vmem:[%s1 + $0x154] sm:$0xf]
      %v729 = vld [vmem:[%s1 + $0x158] sm:$0xf]
      %v730 = vld [vmem:[%s1 + $0x15c] sm:$0xf]
      %v731 = vld [vmem:[%s1 + $0x160] sm:$0xf]
      %v732 = vld [vmem:[%s1 + $0x164] sm:$0xf]
      %v733 = vld [vmem:[%s1 + $0x168] sm:$0xf]
      %v734 = vld [vmem:[%s1 + $0x16c] sm:$0xf]
      %v735 = vld [vmem:[%s1 + $0x170] sm:$0xf]
      %v736 = vld [vmem:[%s1 + $0x174] sm:$0xf]
      %v737 = vld [vmem:[%s1 + $0x178] sm:$0xf]
      %v738 = vld [vmem:[%s1 + $0x17c] sm:$0xf]
      %v739 = vld [vmem:[%s1 + $0x180] sm:$0xf]
      %v740 = vld [vmem:[%s1 + $0x184] sm:$0xf]
      %v741 = vld [vmem:[%s1 + $0x188] sm:$0xf]
      %v742 = vld [vmem:[%s1 + $0x18c] sm:$0xf]
      %v743 = vld [vmem:[%s1 + $0x190] sm:$0xf]
      %v744 = vld [vmem:[%s1 + $0x194] sm:$0xf]
      %v745 = vld [vmem:[%s1 + $0x198] sm:$0xf]
      %v746 = vld [vmem:[%s1 + $0x19c] sm:$0xf]
      %v747 = vld [vmem:[%s1 + $0x1a0] sm:$0xf]
      %v748 = vld [vmem:[%s1 + $0x1a4] sm:$0xf]
      %v749 = vld [vmem:[%s1 + $0x1a8] sm:$0xf]
      %v750 = vld [vmem:[%s1 + $0x1ac] sm:$0xf]
      %v751 = vld [vmem:[%s1 + $0x1b0] sm:$0xf]
      %v752 = vld [vmem:[%s1 + $0x1b4] sm:$0xf]
      %v753 = vld [vmem:[%s1 + $0x1b8] sm:$0xf]
      %v754 = vld [vmem:[%s1 + $0x1bc] sm:$0xf]
      %v755 = vld [vmem:[%s1 + $0x1c0] sm:$0xf]
      %v756 = vld [vmem:[%s1 + $0x1c4] sm:$0xf]
      %v757 = vld [vmem:[%s1 + $0x1c8] sm:$0xf]
      %v758 = vld [vmem:[%s1 + $0x1cc] sm:$0xf]
      %v759 = vld [vmem:[%s1 + $0x1d0] sm:$0xf]
      %v760 = vld [vmem:[%s1 + $0x1d4] sm:$0xf]
      %v761 = vld [vmem:[%s1 + $0x1d8] sm:$0xf]
      %v762 = vld [vmem:[%s1 + $0x1dc] sm:$0xf]
      %v763 = vld [vmem:[%s1 + $0x1e0] sm:$0xf]
      %v764 = vld [vmem:[%s1 + $0x1e4] sm:$0xf]
      %v765 = vld [vmem:[%s1 + $0x1e8] sm:$0xf]
      %v766 = vld [vmem:[%s1 + $0x1ec] sm:$0xf]
      %v767 = vld [vmem:[%s1 + $0x1f0] sm:$0xf]
      %v768 = vld [vmem:[%s1 + $0x1f4] sm:$0xf]
      %v769 = vld [vmem:[%s1 + $0x1f8] sm:$0xf]
      %v770 = vld [vmem:[%s1 + $0x1fc] sm:$0xf]
      %v771 = vld [vmem:[%s1 + $0x200] sm:$0xf]
      %v772 = vld [vmem:[%s1 + $0x204] sm:$0xf]
      %v773 = vld [vmem:[%s1 + $0x208] sm:$0xf]
      %v774 = vld [vmem:[%s1 + $0x20c] sm:$0xf]
      %v775 = vld [vmem:[%s1 + $0x210] sm:$0xf]
      %v776 = vld [vmem:[%s1 + $0x214] sm:$0xf]
      %v777 = vld [vmem:[%s1 + $0x218] sm:$0xf]
      %v778 = vld [vmem:[%s1 + $0x21c] sm:$0xf]
      %v779 = vld [vmem:[%s1 + $0x220] sm:$0xf]
      %v780 = vld [vmem:[%s1 + $0x224] sm:$0xf]
      %v781 = vld [vmem:[%s1 + $0x228] sm:$0xf]
      %v782 = vld [vmem:[%s1 + $0x22c] sm:$0xf]
      %v783 = vld [vmem:[%s1 + $0x230] sm:$0xf]
      %v784 = vld [vmem:[%s1 + $0x234] sm:$0xf]
      %v785 = vld [vmem:[%s1 + $0x238] sm:$0xf]
      %v786 = vld [vmem:[%s1 + $0x23c] sm:$0xf]
      %v931 = vunpack.c.l.b16 %v643
      %v932 = vunpack.c.l.b16 %v644
      %v933 = vunpack.c.l.b16 %v645
      %v934 = vunpack.c.l.b16 %v646
      %v935 = vunpack.c.l.b16 %v647
      %v936 = vunpack.c.l.b16 %v648
      %v937 = vunpack.c.l.b16 %v649
      %v938 = vunpack.c.l.b16 %v650
      %v939 = vunpack.c.l.b16 %v651
      %v940 = vunpack.c.l.b16 %v652
      %v941 = vunpack.c.l.b16 %v653
      %v942 = vunpack.c.l.b16 %v654
      %v943 = vunpack.c.l.b16 %v655
      %v944 = vunpack.c.l.b16 %v656
      %v945 = vunpack.c.l.b16 %v657
      %v946 = vunpack.c.l.b16 %v658
      %v947 = vunpack.c.l.b16 %v659
      %v948 = vunpack.c.l.b16 %v660
      %v949 = vunpack.c.l.b16 %v661
      %v950 = vunpack.c.l.b16 %v662
      %v951 = vunpack.c.l.b16 %v663
      %v952 = vunpack.c.l.b16 %v664
      %v953 = vunpack.c.l.b16 %v665
      %v954 = vunpack.c.l.b16 %v666
      %v955 = vunpack.c.l.b16 %v667
      %v956 = vunpack.c.l.b16 %v668
      %v957 = vunpack.c.l.b16 %v669
      %v958 = vunpack.c.l.b16 %v670
      %v959 = vunpack.c.l.b16 %v671
      %v960 = vunpack.c.l.b16 %v672
      %v961 = vunpack.c.l.b16 %v673
      %v962 = vunpack.c.l.b16 %v674
      %v963 = vunpack.c.l.b16 %v675
      %v964 = vunpack.c.l.b16 %v676
      %v965 = vunpack.c.l.b16 %v677
      %v966 = vunpack.c.l.b16 %v678
      %v967 = vunpack.c.l.b16 %v679
      %v968 = vunpack.c.l.b16 %v680
      %v969 = vunpack.c.l.b16 %v681
      %v970 = vunpack.c.l.b16 %v682
      %v971 = vunpack.c.l.b16 %v683
      %v972 = vunpack.c.l.b16 %v684
      %v973 = vunpack.c.l.b16 %v685
      %v974 = vunpack.c.l.b16 %v686
      %v975 = vunpack.c.l.b16 %v687
      %v976 = vunpack.c.l.b16 %v688
      %v977 = vunpack.c.l.b16 %v689
      %v978 = vunpack.c.l.b16 %v690
      %v979 = vunpack.c.l.b16 %v691
      %v980 = vunpack.c.l.b16 %v692
      %v981 = vunpack.c.l.b16 %v693
      %v982 = vunpack.c.l.b16 %v694
      %v983 = vunpack.c.l.b16 %v695
      %v984 = vunpack.c.l.b16 %v696
      %v985 = vunpack.c.l.b16 %v697
      %v986 = vunpack.c.l.b16 %v698
      %v987 = vunpack.c.l.b16 %v699
      %v988 = vunpack.c.l.b16 %v700
      %v989 = vunpack.c.l.b16 %v701
      %v990 = vunpack.c.l.b16 %v702
      %v991 = vunpack.c.l.b16 %v703
      %v992 = vunpack.c.l.b16 %v704
      %v993 = vunpack.c.l.b16 %v705
      %v994 = vunpack.c.l.b16 %v706
      %v995 = vunpack.c.l.b16 %v707
      %v996 = vunpack.c.l.b16 %v708
      %v997 = vunpack.c.l.b16 %v709
      %v998 = vunpack.c.l.b16 %v710
      %v999 = vunpack.c.l.b16 %v711
      %v1000 = vunpack.c.l.b16 %v712
      %v1001 = vunpack.c.l.b16 %v713
      %v1002 = vunpack.c.l.b16 %v714
      %v1003 = vunpack.c.l.b16 %v715
      %v1004 = vunpack.c.l.b16 %v716
      %v1005 = vunpack.c.l.b16 %v717
      %v1006 = vunpack.c.l.b16 %v718
      %v1007 = vunpack.c.l.b16 %v719
      %v1008 = vunpack.c.l.b16 %v720
      %v1009 = vunpack.c.l.b16 %v721
      %v1010 = vunpack.c.l.b16 %v722
      %v1011 = vunpack.c.l.b16 %v723
      %v1012 = vunpack.c.l.b16 %v724
      %v1013 = vunpack.c.l.b16 %v725
      %v1014 = vunpack.c.l.b16 %v726
      %v1015 = vunpack.c.l.b16 %v727
      %v1016 = vunpack.c.l.b16 %v728
      %v1017 = vunpack.c.l.b16 %v729
      %v1018 = vunpack.c.l.b16 %v730
      %v1019 = vunpack.c.l.b16 %v731
      %v1020 = vunpack.c.l.b16 %v732
      %v1021 = vunpack.c.l.b16 %v733
      %v1022 = vunpack.c.l.b16 %v734
      %v1023 = vunpack.c.l.b16 %v735
      %v1024 = vunpack.c.l.b16 %v736
      %v1025 = vunpack.c.l.b16 %v737
      %v1026 = vunpack.c.l.b16 %v738
      %v1027 = vunpack.c.l.b16 %v739
      %v1028 = vunpack.c.l.b16 %v740
      %v1029 = vunpack.c.l.b16 %v741
      %v1030 = vunpack.c.l.b16 %v742
      %v1031 = vunpack.c.l.b16 %v743
      %v1032 = vunpack.c.l.b16 %v744
      %v1033 = vunpack.c.l.b16 %v745
      %v1034 = vunpack.c.l.b16 %v746
      %v1035 = vunpack.c.l.b16 %v747
      %v1036 = vunpack.c.l.b16 %v748
      %v1037 = vunpack.c.l.b16 %v749
      %v1038 = vunpack.c.l.b16 %v750
      %v1039 = vunpack.c.l.b16 %v751
      %v1040 = vunpack.c.l.b16 %v752
      %v1041 = vunpack.c.l.b16 %v753
      %v1042 = vunpack.c.l.b16 %v754
      %v1043 = vunpack.c.l.b16 %v755
      %v1044 = vunpack.c.l.b16 %v756
      %v1045 = vunpack.c.l.b16 %v757
      %v1046 = vunpack.c.l.b16 %v758
      %v1047 = vunpack.c.l.b16 %v759
      %v1048 = vunpack.c.l.b16 %v760
      %v1049 = vunpack.c.l.b16 %v761
      %v1050 = vunpack.c.l.b16 %v762
      %v1051 = vunpack.c.l.b16 %v763
      %v1052 = vunpack.c.l.b16 %v764
      %v1053 = vunpack.c.l.b16 %v765
      %v1054 = vunpack.c.l.b16 %v766
      %v1055 = vunpack.c.l.b16 %v767
      %v1056 = vunpack.c.l.b16 %v768
      %v1057 = vunpack.c.l.b16 %v769
      %v1058 = vunpack.c.l.b16 %v770
      %v1059 = vunpack.c.l.b16 %v771
      %v1060 = vunpack.c.l.b16 %v772
      %v1061 = vunpack.c.l.b16 %v773
      %v1062 = vunpack.c.l.b16 %v774
      %v1063 = vunpack.c.l.b16 %v775
      %v1064 = vunpack.c.l.b16 %v776
      %v1065 = vunpack.c.l.b16 %v777
      %v1066 = vunpack.c.l.b16 %v778
      %v1067 = vunpack.c.l.b16 %v779
      %v1068 = vunpack.c.l.b16 %v780
      %v1069 = vunpack.c.l.b16 %v781
      %v1070 = vunpack.c.l.b16 %v782
      %v1071 = vunpack.c.l.b16 %v783
      %v1072 = vunpack.c.l.b16 %v784
      %v1073 = vunpack.c.l.b16 %v785
      %v1074 = vunpack.c.l.b16 %v786
      %v1075 = vpack.c.b16 %v932, %v931
      %v1076 = vpack.c.b16 %v934, %v933
      %v1077 = vpack.c.b16 %v936, %v935
      %v1078 = vpack.c.b16 %v938, %v937
      %v1079 = vpack.c.b16 %v940, %v939
      %v1080 = vpack.c.b16 %v942, %v941
      %v1081 = vpack.c.b16 %v944, %v943
      %v1082 = vpack.c.b16 %v946, %v945
      %v1083 = vpack.c.b16 %v948, %v947
      %v1084 = vpack.c.b16 %v950, %v949
      %v1085 = vpack.c.b16 %v952, %v951
      %v1086 = vpack.c.b16 %v954, %v953
      %v1087 = vpack.c.b16 %v956, %v955
      %v1088 = vpack.c.b16 %v958, %v957
      %v1089 = vpack.c.b16 %v960, %v959
      %v1090 = vpack.c.b16 %v962, %v961
      %v1091 = vpack.c.b16 %v964, %v963
      %v1092 = vpack.c.b16 %v966, %v965
      %v1093 = vpack.c.b16 %v968, %v967
      %v1094 = vpack.c.b16 %v970, %v969
      %v1095 = vpack.c.b16 %v972, %v971
      %v1096 = vpack.c.b16 %v974, %v973
      %v1097 = vpack.c.b16 %v976, %v975
      %v1098 = vpack.c.b16 %v978, %v977
      %v1099 = vpack.c.b16 %v980, %v979
      %v1100 = vpack.c.b16 %v982, %v981
      %v1101 = vpack.c.b16 %v984, %v983
      %v1102 = vpack.c.b16 %v986, %v985
      %v1103 = vpack.c.b16 %v988, %v987
      %v1104 = vpack.c.b16 %v990, %v989
      %v1105 = vpack.c.b16 %v992, %v991
      %v1106 = vpack.c.b16 %v994, %v993
      %v1107 = vpack.c.b16 %v996, %v995
      %v1108 = vpack.c.b16 %v998, %v997
      %v1109 = vpack.c.b16 %v1000, %v999
      %v1110 = vpack.c.b16 %v1002, %v1001
      %v1111 = vpack.c.b16 %v1004, %v1003
      %v1112 = vpack.c.b16 %v1006, %v1005
      %v1113 = vpack.c.b16 %v1008, %v1007
      %v1114 = vpack.c.b16 %v1010, %v1009
      %v1115 = vpack.c.b16 %v1012, %v1011
      %v1116 = vpack.c.b16 %v1014, %v1013
      %v1117 = vpack.c.b16 %v1016, %v1015
      %v1118 = vpack.c.b16 %v1018, %v1017
      %v1119 = vpack.c.b16 %v1020, %v1019
      %v1120 = vpack.c.b16 %v1022, %v1021
      %v1121 = vpack.c.b16 %v1024, %v1023
      %v1122 = vpack.c.b16 %v1026, %v1025
      %v1123 = vpack.c.b16 %v1028, %v1027
      %v1124 = vpack.c.b16 %v1030, %v1029
      %v1125 = vpack.c.b16 %v1032, %v1031
      %v1126 = vpack.c.b16 %v1034, %v1033
      %v1127 = vpack.c.b16 %v1036, %v1035
      %v1128 = vpack.c.b16 %v1038, %v1037
      %v1129 = vpack.c.b16 %v1040, %v1039
      %v1130 = vpack.c.b16 %v1042, %v1041
      %v1131 = vpack.c.b16 %v1044, %v1043
      %v1132 = vpack.c.b16 %v1046, %v1045
      %v1133 = vpack.c.b16 %v1048, %v1047
      %v1134 = vpack.c.b16 %v1050, %v1049
      %v1135 = vpack.c.b16 %v1052, %v1051
      %v1136 = vpack.c.b16 %v1054, %v1053
      %v1137 = vpack.c.b16 %v1056, %v1055
      %v1138 = vpack.c.b16 %v1058, %v1057
      %v1139 = vpack.c.b16 %v1060, %v1059
      %v1140 = vpack.c.b16 %v1062, %v1061
      %v1141 = vpack.c.b16 %v1064, %v1063
      %v1142 = vpack.c.b16 %v1066, %v1065
      %v1143 = vpack.c.b16 %v1068, %v1067
      %v1144 = vpack.c.b16 %v1070, %v1069
      %v1145 = vpack.c.b16 %v1072, %v1071
      %v1146 = vpack.c.b16 %v1074, %v1073
      %1219 = vmatprep.subr.bf16.mxu0 0
      %1220 = vmatpush1.bf16.msra.mxu0 %v1082
      %1221 = vmatprep.subr.bf16.mxu0 0
      %1222 = vmatpush1.bf16.msra.mxu0 %v1081
      %1223 = vmatprep.subr.bf16.mxu0 0
      %1224 = vmatpush1.bf16.msra.mxu0 %v1080
      %1225 = vmatprep.subr.bf16.mxu0 0
      %1226 = vmatpush1.bf16.msra.mxu0 %v1079
      %1227 = vmatprep.subr.bf16.mxu0 0
      %1228 = vmatpush1.bf16.msra.mxu0 %v1078
      %1229 = vmatprep.subr.bf16.mxu0 0
      %1230 = vmatpush1.bf16.msra.mxu0 %v1077
      %1231 = vmatprep.subr.bf16.mxu0 0
      %1232 = vmatpush1.bf16.msra.mxu0 %v1076
      %1233 = vmatprep.subr.bf16.mxu0 0
      %1234 = vmatpush1.bf16.msra.mxu0 %v1075
      %1235 = vmatprep.subr.bf16.mxu0 0
      %1236 = vmatpush2.bf16.msra.mxu0 %v1090
      %1237 = vmatprep.subr.bf16.mxu0 0
      %1238 = vmatpush2.bf16.msra.mxu0 %v1089
      %1239 = vmatprep.subr.bf16.mxu0 0
      %1240 = vmatpush2.bf16.msra.mxu0 %v1088
      %1241 = vmatprep.subr.bf16.mxu0 0
      %1242 = vmatpush2.bf16.msra.mxu0 %v1087
      %1243 = vmatprep.subr.bf16.mxu0 0
      %1244 = vmatpush2.bf16.msra.mxu0 %v1086
      %1245 = vmatprep.subr.bf16.mxu0 0
      %1246 = vmatpush2.bf16.msra.mxu0 %v1085
      %1247 = vmatprep.subr.bf16.mxu0 0
      %1248 = vmatpush2.bf16.msra.mxu0 %v1084
      %1249 = vmatprep.subr.bf16.mxu0 0
      %1250 = vmatpush2.bf16.msra.mxu0 %v1083
      %1251 = vmatprep.mubr.bf16.mxu0 %v582
      %1252 = vmatmul.mubr.bf16.gmra.mxu0 %v570
      %v1253 = vpop.f32.mrf.mxu0
      %v1254 = vadd.f32 0.0, %v1253
      %v1255 = vpop.f32.mrf.mxu0
      %v1256 = vpop.f32.mrf.mxu0
      %v1257 = vadd.f32 0.0, %v1256
      %v1258 = vpop.f32.mrf.mxu0
      %1259 = vmatprep.mubr.bf16.mxu0 %v583
      %1260 = vmatmul.mubr.bf16.gmra.mxu0 %v571
      %v1261 = vpop.f32.mrf.mxu0
      %v1262 = vadd.f32 0.0, %v1261
      %v1263 = vpop.f32.mrf.mxu0
      %v1264 = vpop.f32.mrf.mxu0
      %v1265 = vadd.f32 0.0, %v1264
      %v1266 = vpop.f32.mrf.mxu0
      %1267 = vdwg.mxu0
      %1268 = vmatprep.subr.bf16.mxu0 0
      %1269 = vmatpush1.bf16.msra.mxu0 %v1098
      %1270 = vmatprep.subr.bf16.mxu0 0
      %1271 = vmatpush1.bf16.msra.mxu0 %v1097
      %1272 = vmatprep.subr.bf16.mxu0 0
      %1273 = vmatpush1.bf16.msra.mxu0 %v1096
      %1274 = vmatprep.subr.bf16.mxu0 0
      %1275 = vmatpush1.bf16.msra.mxu0 %v1095
      %1276 = vmatprep.subr.bf16.mxu0 0
      %1277 = vmatpush1.bf16.msra.mxu0 %v1094
      %1278 = vmatprep.subr.bf16.mxu0 0
      %1279 = vmatpush1.bf16.msra.mxu0 %v1093
      %1280 = vmatprep.subr.bf16.mxu0 0
      %1281 = vmatpush1.bf16.msra.mxu0 %v1092
      %1282 = vmatprep.subr.bf16.mxu0 0
      %1283 = vmatpush1.bf16.msra.mxu0 %v1091
      %1284 = vmatprep.subr.bf16.mxu0 0
      %1285 = vmatpush2.bf16.msra.mxu0 %v1106
      %1286 = vmatprep.subr.bf16.mxu0 0
      %1287 = vmatpush2.bf16.msra.mxu0 %v1105
      %1288 = vmatprep.subr.bf16.mxu0 0
      %1289 = vmatpush2.bf16.msra.mxu0 %v1104
      %1290 = vmatprep.subr.bf16.mxu0 0
      %1291 = vmatpush2.bf16.msra.mxu0 %v1103
      %1292 = vmatprep.subr.bf16.mxu0 0
      %1293 = vmatpush2.bf16.msra.mxu0 %v1102
      %1294 = vmatprep.subr.bf16.mxu0 0
      %1295 = vmatpush2.bf16.msra.mxu0 %v1101
      %1296 = vmatprep.subr.bf16.mxu0 0
      %1297 = vmatpush2.bf16.msra.mxu0 %v1100
      %1298 = vmatprep.subr.bf16.mxu0 0
      %1299 = vmatpush2.bf16.msra.mxu0 %v1099
      %1300 = vmatprep.mubr.bf16.mxu0 %v602
      %1301 = vmatmul.mubr.bf16.gmra.mxu0 %v590
      %v1302 = vpop.f32.mrf.mxu0
      %v1303 = vadd.f32 %v1254, %v1302
      %v1304 = vpop.f32.mrf.mxu0
      %v1305 = vpop.f32.mrf.mxu0
      %v1306 = vadd.f32 %v1257, %v1305
      %v1307 = vpop.f32.mrf.mxu0
      %1308 = vmatprep.mubr.bf16.mxu0 %v603
      %1309 = vmatmul.mubr.bf16.gmra.mxu0 %v591
      %v1310 = vpop.f32.mrf.mxu0
      %v1311 = vadd.f32 %v1262, %v1310
      %v1312 = vpop.f32.mrf.mxu0
      %v1313 = vpop.f32.mrf.mxu0
      %v1314 = vadd.f32 %v1265, %v1313
      %v1315 = vpop.f32.mrf.mxu0
      %1316 = vdwg.mxu0
      %1317 = vmatprep.subr.bf16.mxu0 0
      %1318 = vmatpush1.bf16.msra.mxu0 %v1114
      %1319 = vmatprep.subr.bf16.mxu0 0
      %1320 = vmatpush1.bf16.msra.mxu0 %v1113
      %1321 = vmatprep.subr.bf16.mxu0 0
      %1322 = vmatpush1.bf16.msra.mxu0 %v1112
      %1323 = vmatprep.subr.bf16.mxu0 0
      %1324 = vmatpush1.bf16.msra.mxu0 %v1111
      %1325 = vmatprep.subr.bf16.mxu0 0
      %1326 = vmatpush1.bf16.msra.mxu0 %v1110
      %1327 = vmatprep.subr.bf16.mxu0 0
      %1328 = vmatpush1.bf16.msra.mxu0 %v1109
      %1329 = vmatprep.subr.bf16.mxu0 0
      %1330 = vmatpush1.bf16.msra.mxu0 %v1108
      %1331 = vmatprep.subr.bf16.mxu0 0
      %1332 = vmatpush1.bf16.msra.mxu0 %v1107
      %1333 = vmatprep.subr.bf16.mxu0 0
      %1334 = vmatpush2.bf16.msra.mxu0 %v1122
      %1335 = vmatprep.subr.bf16.mxu0 0
      %1336 = vmatpush2.bf16.msra.mxu0 %v1121
      %1337 = vmatprep.subr.bf16.mxu0 0
      %1338 = vmatpush2.bf16.msra.mxu0 %v1120
      %1339 = vmatprep.subr.bf16.mxu0 0
      %1340 = vmatpush2.bf16.msra.mxu0 %v1119
      %1341 = vmatprep.subr.bf16.mxu0 0
      %1342 = vmatpush2.bf16.msra.mxu0 %v1118
      %1343 = vmatprep.subr.bf16.mxu0 0
      %1344 = vmatpush2.bf16.msra.mxu0 %v1117
      %1345 = vmatprep.subr.bf16.mxu0 0
      %1346 = vmatpush2.bf16.msra.mxu0 %v1116
      %1347 = vmatprep.subr.bf16.mxu0 0
      %1348 = vmatpush2.bf16.msra.mxu0 %v1115
      %1349 = vmatprep.mubr.bf16.mxu0 %v622
      %1350 = vmatmul.mubr.bf16.gmra.mxu0 %v614
      %v1351 = vpop.f32.mrf.mxu0
      %v1352 = vadd.f32 %v1303, %v1351
      %v1353 = vpop.f32.mrf.mxu0
      %v1354 = vpop.f32.mrf.mxu0
      %v1355 = vadd.f32 %v1306, %v1354
      %v1356 = vpop.f32.mrf.mxu0
      %1357 = vmatprep.mubr.bf16.mxu0 %v623
      %1358 = vmatmul.mubr.bf16.gmra.mxu0 %v615
      %v1359 = vpop.f32.mrf.mxu0
      %v1360 = vadd.f32 %v1311, %v1359
      %v1361 = vpop.f32.mrf.mxu0
      %v1362 = vpop.f32.mrf.mxu0
      %v1363 = vadd.f32 %v1314, %v1362
      %v1364 = vpop.f32.mrf.mxu0
      %1365 = vdwg.mxu0
      %1366 = vmatprep.subr.bf16.mxu0 0
      %1367 = vmatpush1.bf16.msra.mxu0 %v1130
      %1368 = vmatprep.subr.bf16.mxu0 0
      %1369 = vmatpush1.bf16.msra.mxu0 %v1129
      %1370 = vmatprep.subr.bf16.mxu0 0
      %1371 = vmatpush1.bf16.msra.mxu0 %v1128
      %1372 = vmatprep.subr.bf16.mxu0 0
      %1373 = vmatpush1.bf16.msra.mxu0 %v1127
      %1374 = vmatprep.subr.bf16.mxu0 0
      %1375 = vmatpush1.bf16.msra.mxu0 %v1126
      %1376 = vmatprep.subr.bf16.mxu0 0
      %1377 = vmatpush1.bf16.msra.mxu0 %v1125
      %1378 = vmatprep.subr.bf16.mxu0 0
      %1379 = vmatpush1.bf16.msra.mxu0 %v1124
      %1380 = vmatprep.subr.bf16.mxu0 0
      %1381 = vmatpush1.bf16.msra.mxu0 %v1123
      %1382 = vmatprep.subr.bf16.mxu0 0
      %1383 = vmatpush2.bf16.msra.mxu0 %v1138
      %1384 = vmatprep.subr.bf16.mxu0 0
      %1385 = vmatpush2.bf16.msra.mxu0 %v1137
      %1386 = vmatprep.subr.bf16.mxu0 0
      %1387 = vmatpush2.bf16.msra.mxu0 %v1136
      %1388 = vmatprep.subr.bf16.mxu0 0
      %1389 = vmatpush2.bf16.msra.mxu0 %v1135
      %1390 = vmatprep.subr.bf16.mxu0 0
      %1391 = vmatpush2.bf16.msra.mxu0 %v1134
      %1392 = vmatprep.subr.bf16.mxu0 0
      %1393 = vmatpush2.bf16.msra.mxu0 %v1133
      %1394 = vmatprep.subr.bf16.mxu0 0
      %1395 = vmatpush2.bf16.msra.mxu0 %v1132
      %1396 = vmatprep.subr.bf16.mxu0 0
      %1397 = vmatpush2.bf16.msra.mxu0 %v1131
      %1398 = vmatprep.mubr.bf16.mxu0 %v634
      %1399 = vmatmul.mubr.bf16.gmra.mxu0 %v628
      %v1400 = vpop.f32.mrf.mxu0
      %v1401 = vadd.f32 %v1352, %v1400
      %v1402 = vpop.f32.mrf.mxu0
      %v1403 = vpop.f32.mrf.mxu0
      %v1404 = vadd.f32 %v1355, %v1403
      %v1405 = vpop.f32.mrf.mxu0
      %1406 = vmatprep.mubr.bf16.mxu0 %v635
      %1407 = vmatmul.mubr.bf16.gmra.mxu0 %v629
      %v1408 = vpop.f32.mrf.mxu0
      %v1409 = vadd.f32 %v1360, %v1408
      %v1410 = vpop.f32.mrf.mxu0
      %v1411 = vpop.f32.mrf.mxu0
      %v1412 = vadd.f32 %v1363, %v1411
      %v1413 = vpop.f32.mrf.mxu0
      %1414 = vdwg.mxu0
      %1415 = vmatprep.subr.bf16.mxu0 0
      %1416 = vmatpush1.bf16.msra.mxu0 %v1146
      %1417 = vmatprep.subr.bf16.mxu0 0
      %1418 = vmatpush1.bf16.msra.mxu0 %v1145
      %1419 = vmatprep.subr.bf16.mxu0 0
      %1420 = vmatpush1.bf16.msra.mxu0 %v1144
      %1421 = vmatprep.subr.bf16.mxu0 0
      %1422 = vmatpush1.bf16.msra.mxu0 %v1143
      %1423 = vmatprep.subr.bf16.mxu0 0
      %1424 = vmatpush1.bf16.msra.mxu0 %v1142
      %1425 = vmatprep.subr.bf16.mxu0 0
      %1426 = vmatpush1.bf16.msra.mxu0 %v1141
      %1427 = vmatprep.subr.bf16.mxu0 0
      %1428 = vmatpush1.bf16.msra.mxu0 %v1140
      %1429 = vmatprep.subr.bf16.mxu0 0
      %1430 = vmatpush1.bf16.msra.mxu0 %v1139
      %1431 = vmatprep.subr.bf16.mxu0 0
      %1432 = vmatpush2.bf16.msra.mxu0 0
      %1433 = vmatprep.subr.bf16.mxu0 0
      %1434 = vmatpush2.bf16.msra.mxu0 0
      %1435 = vmatprep.subr.bf16.mxu0 0
      %1436 = vmatpush2.bf16.msra.mxu0 0
      %1437 = vmatprep.subr.bf16.mxu0 0
      %1438 = vmatpush2.bf16.msra.mxu0 0
      %1439 = vmatprep.subr.bf16.mxu0 0
      %1440 = vmatpush2.bf16.msra.mxu0 0
      %1441 = vmatprep.subr.bf16.mxu0 0
      %1442 = vmatpush2.bf16.msra.mxu0 0
      %1443 = vmatprep.subr.bf16.mxu0 0
      %1444 = vmatpush2.bf16.msra.mxu0 0
      %1445 = vmatprep.subr.bf16.mxu0 0
      %1446 = vmatpush2.bf16.msra.mxu0 0
      %1447 = vmatprep.mubr.bf16.mxu0 0
      %1448 = vmatmul.mubr.bf16.gmra.mxu0 %v639
      %v1449 = vpop.f32.mrf.mxu0
      %v1450 = vadd.f32 %v1401, %v1449
      %v1451 = vpop.f32.mrf.mxu0
      %v1452 = vpop.f32.mrf.mxu0
      %v1453 = vadd.f32 %v1404, %v1452
      %v1454 = vpop.f32.mrf.mxu0
      %1455 = vmatprep.mubr.bf16.mxu0 0
      %1456 = vmatmul.mubr.bf16.gmra.mxu0 %v640
      %v1457 = vpop.f32.mrf.mxu0
      %v1458 = vadd.f32 %v1409, %v1457
      %v1459 = vpop.f32.mrf.mxu0
      %v1460 = vpop.f32.mrf.mxu0
      %v1461 = vadd.f32 %v1412, %v1460
      %v1462 = vpop.f32.mrf.mxu0
      %1463 = vdwg.mxu0
      %v1464 = vld [vmem:[%s2] sm:$0x1]
      %v1466 = vlaneseq
      %v1467 = vshrl.u32 %v1466, 7
      %v1468 = vsub.s32 0, %v1467
      %v1469 = vrot.slane %v1464, %v1468
      %v1471 = vmul.f32 %v1450, %v1469
      %v1472 = vmul.f32 %v1453, %v1469
      %v1473 = vmul.f32 %v1458, %v1469
      %v1474 = vmul.f32 %v1461, %v1469
      %v1475 = vld [vmem:[%s3] sm:$0x1]
      %v1477 = vlaneseq
      %v1478 = vshrl.u32 %v1477, 7
      %v1479 = vsub.s32 0, %v1478
      %v1480 = vrot.slane %v1475, %v1479
      %v1482 = vadd.f32 %v1471, %v1480
      %v1483 = vadd.f32 %v1472, %v1480
      %v1484 = vadd.f32 %v1473, %v1480
      %v1485 = vadd.f32 %v1474, %v1480
      %v1486 = vmax.f32 %v1482, 0.0
      %v1487 = vmax.f32 %v1483, 0.0
      %v1488 = vmax.f32 %v1484, 0.0
      %v1489 = vmax.f32 %v1485, 0.0
      %v1490 = vpack.c.bf16 %v1487, %v1486
      %v1491 = vpack.c.bf16 %v1489, %v1488
      %v1492 = vld [vmem:[%s4] sm:$0xf]
      %v1493 = vld [vmem:[%s4 + $0x4] sm:$0xf]
      %v1494 = vld [vmem:[%s4 + $0x8] sm:$0xf]
      %v1495 = vld [vmem:[%s4 + $0xc] sm:$0xf]
      %v1496 = vld [vmem:[%s4 + $0x10] sm:$0xf]
      %v1497 = vld [vmem:[%s4 + $0x14] sm:$0xf]
      %v1498 = vld [vmem:[%s4 + $0x18] sm:$0xf]
      %v1499 = vld [vmem:[%s4 + $0x1c] sm:$0xf]
      %v1500 = vld [vmem:[%s4 + $0x20] sm:$0xf]
      %v1501 = vld [vmem:[%s4 + $0x24] sm:$0xf]
      %v1502 = vld [vmem:[%s4 + $0x28] sm:$0xf]
      %v1503 = vld [vmem:[%s4 + $0x2c] sm:$0xf]
      %v1504 = vld [vmem:[%s4 + $0x30] sm:$0xf]
      %v1505 = vld [vmem:[%s4 + $0x34] sm:$0xf]
      %v1506 = vld [vmem:[%s4 + $0x38] sm:$0xf]
      %v1507 = vld [vmem:[%s4 + $0x3c] sm:$0xf]
      %v1508 = vld [vmem:[%s380] sm:$0xf]
      %v1509 = vld [vmem:[%s380 + $0x4] sm:$0xf]
      %v1510 = vld [vmem:[%s380 + $0x8] sm:$0xf]
      %v1511 = vld [vmem:[%s380 + $0xc] sm:$0xf]
      %v1512 = vunpack.c.l.bf16 %v1508
      %v1513 = vunpack.c.l.bf16 %v1509
      %v1514 = vunpack.c.l.bf16 %v1510
      %v1515 = vunpack.c.l.bf16 %v1511
      %v1516 = vld [vmem:[%s6] sm:$0x1]
      %v1518 = vlaneseq
      %v1519 = vshrl.u32 %v1518, 7
      %v1520 = vsub.s32 0, %v1519
      %v1521 = vrot.slane %v1516, %v1520
      %v1523 = vmul.f32 %v1512, %v1521
      %v1524 = vmul.f32 %v1513, %v1521
      %v1525 = vmul.f32 %v1514, %v1521
      %v1526 = vmul.f32 %v1515, %v1521
      %v1527 = vld [vmem:[%s7] sm:$0x1]
      %v1529 = vlaneseq
      %v1530 = vshrl.u32 %v1529, 7
      %v1531 = vsub.s32 0, %v1530
      %v1532 = vrot.slane %v1527, %v1531
      %v1534 = vadd.f32 %v1523, %v1532
      %v1535 = vadd.f32 %v1524, %v1532
      %v1536 = vadd.f32 %v1525, %v1532
      %v1537 = vadd.f32 %v1526, %v1532
      %v1538 = vmax.f32 %v1534, 0.0
      %v1539 = vmax.f32 %v1535, 0.0
      %v1540 = vmax.f32 %v1536, 0.0
      %v1541 = vmax.f32 %v1537, 0.0
      %v1542 = vpack.c.bf16 %v1539, %v1538
      %v1543 = vpack.c.bf16 %v1541, %v1540
      %v1544 = vld [vmem:[%s8] sm:$0xf]
      %v1545 = vld [vmem:[%s8 + $0x4] sm:$0xf]
      %v1546 = vld [vmem:[%s8 + $0x8] sm:$0xf]
      %v1547 = vld [vmem:[%s8 + $0xc] sm:$0xf]
      %v1548 = vld [vmem:[%s8 + $0x10] sm:$0xf]
      %v1549 = vld [vmem:[%s8 + $0x14] sm:$0xf]
      %v1550 = vld [vmem:[%s8 + $0x18] sm:$0xf]
      %v1551 = vld [vmem:[%s8 + $0x1c] sm:$0xf]
      %v1552 = vld [vmem:[%s8 + $0x20] sm:$0xf]
      %v1553 = vld [vmem:[%s8 + $0x24] sm:$0xf]
      %v1554 = vld [vmem:[%s8 + $0x28] sm:$0xf]
      %v1555 = vld [vmem:[%s8 + $0x2c] sm:$0xf]
      %v1556 = vld [vmem:[%s8 + $0x30] sm:$0xf]
      %v1557 = vld [vmem:[%s8 + $0x34] sm:$0xf]
      %v1558 = vld [vmem:[%s8 + $0x38] sm:$0xf]
      %v1559 = vld [vmem:[%s8 + $0x3c] sm:$0xf]
      %v1576 = vunpack.c.l.b16 %v1544
      %v1577 = vunpack.c.l.b16 %v1545
      %v1578 = vunpack.c.l.b16 %v1546
      %v1579 = vunpack.c.l.b16 %v1547
      %v1580 = vunpack.c.l.b16 %v1548
      %v1581 = vunpack.c.l.b16 %v1549
      %v1582 = vunpack.c.l.b16 %v1550
      %v1583 = vunpack.c.l.b16 %v1551
      %v1584 = vunpack.c.l.b16 %v1552
      %v1585 = vunpack.c.l.b16 %v1553
      %v1586 = vunpack.c.l.b16 %v1554
      %v1587 = vunpack.c.l.b16 %v1555
      %v1588 = vunpack.c.l.b16 %v1556
      %v1589 = vunpack.c.l.b16 %v1557
      %v1590 = vunpack.c.l.b16 %v1558
      %v1591 = vunpack.c.l.b16 %v1559
      %v1592 = vpack.c.b16 %v1577, %v1576
      %v1593 = vpack.c.b16 %v1579, %v1578
      %v1594 = vpack.c.b16 %v1581, %v1580
      %v1595 = vpack.c.b16 %v1583, %v1582
      %v1596 = vpack.c.b16 %v1585, %v1584
      %v1597 = vpack.c.b16 %v1587, %v1586
      %v1598 = vpack.c.b16 %v1589, %v1588
      %v1599 = vpack.c.b16 %v1591, %v1590
      %1608 = vmatprep.subr.bf16.mxu0 0
      %1609 = vmatpush1.bf16.msra.mxu0 %v1599
      %1610 = vmatprep.subr.bf16.mxu0 0
      %1611 = vmatpush1.bf16.msra.mxu0 %v1598
      %1612 = vmatprep.subr.bf16.mxu0 0
      %1613 = vmatpush1.bf16.msra.mxu0 %v1597
      %1614 = vmatprep.subr.bf16.mxu0 0
      %1615 = vmatpush1.bf16.msra.mxu0 %v1596
      %1616 = vmatprep.subr.bf16.mxu0 0
      %1617 = vmatpush1.bf16.msra.mxu0 %v1595
      %1618 = vmatprep.subr.bf16.mxu0 0
      %1619 = vmatpush1.bf16.msra.mxu0 %v1594
      %1620 = vmatprep.subr.bf16.mxu0 0
      %1621 = vmatpush1.bf16.msra.mxu0 %v1593
      %1622 = vmatprep.subr.bf16.mxu0 0
      %1623 = vmatpush1.bf16.msra.mxu0 %v1592
      %1624 = vmatprep.subr.bf16.mxu0 0
      %1625 = vmatpush2.bf16.msra.mxu0 0
      %1626 = vmatprep.subr.bf16.mxu0 0
      %1627 = vmatpush2.bf16.msra.mxu0 0
      %1628 = vmatprep.subr.bf16.mxu0 0
      %1629 = vmatpush2.bf16.msra.mxu0 0
      %1630 = vmatprep.subr.bf16.mxu0 0
      %1631 = vmatpush2.bf16.msra.mxu0 0
      %1632 = vmatprep.subr.bf16.mxu0 0
      %1633 = vmatpush2.bf16.msra.mxu0 0
      %1634 = vmatprep.subr.bf16.mxu0 0
      %1635 = vmatpush2.bf16.msra.mxu0 0
      %1636 = vmatprep.subr.bf16.mxu0 0
      %1637 = vmatpush2.bf16.msra.mxu0 0
      %1638 = vmatprep.subr.bf16.mxu0 0
      %1639 = vmatpush2.bf16.msra.mxu0 0
      %1640 = vmatprep.mubr.bf16.mxu0 0
      %1641 = vmatmul.mubr.bf16.gmra.mxu0 %v1542
      %v1642 = vpop.f32.mrf.mxu0
      %v1643 = vadd.f32 0.0, %v1642
      %v1644 = vpop.f32.mrf.mxu0
      %v1645 = vpop.f32.mrf.mxu0
      %v1646 = vadd.f32 0.0, %v1645
      %v1647 = vpop.f32.mrf.mxu0
      %1648 = vmatprep.mubr.bf16.mxu0 0
      %1649 = vmatmul.mubr.bf16.gmra.mxu0 %v1543
      %v1650 = vpop.f32.mrf.mxu0
      %v1651 = vadd.f32 0.0, %v1650
      %v1652 = vpop.f32.mrf.mxu0
      %v1653 = vpop.f32.mrf.mxu0
      %v1654 = vadd.f32 0.0, %v1653
      %v1655 = vpop.f32.mrf.mxu0
      %1656 = vdwg.mxu0
      %v1673 = vunpack.c.l.b16 %v1492
      %v1674 = vunpack.c.l.b16 %v1493
      %v1675 = vunpack.c.l.b16 %v1494
      %v1676 = vunpack.c.l.b16 %v1495
      %v1677 = vunpack.c.l.b16 %v1496
      %v1678 = vunpack.c.l.b16 %v1497
      %v1679 = vunpack.c.l.b16 %v1498
      %v1680 = vunpack.c.l.b16 %v1499
      %v1681 = vunpack.c.l.b16 %v1500
      %v1682 = vunpack.c.l.b16 %v1501
      %v1683 = vunpack.c.l.b16 %v1502
      %v1684 = vunpack.c.l.b16 %v1503
      %v1685 = vunpack.c.l.b16 %v1504
      %v1686 = vunpack.c.l.b16 %v1505
      %v1687 = vunpack.c.l.b16 %v1506
      %v1688 = vunpack.c.l.b16 %v1507
      %v1689 = vpack.c.b16 %v1674, %v1673
      %v1690 = vpack.c.b16 %v1676, %v1675
      %v1691 = vpack.c.b16 %v1678, %v1677
      %v1692 = vpack.c.b16 %v1680, %v1679
      %v1693 = vpack.c.b16 %v1682, %v1681
      %v1694 = vpack.c.b16 %v1684, %v1683
      %v1695 = vpack.c.b16 %v1686, %v1685
      %v1696 = vpack.c.b16 %v1688, %v1687
      %1705 = vmatprep.subr.bf16.mxu0 0
      %1706 = vmatpush1.bf16.msra.mxu0 %v1696
      %1707 = vmatprep.subr.bf16.mxu0 0
      %1708 = vmatpush1.bf16.msra.mxu0 %v1695
      %1709 = vmatprep.subr.bf16.mxu0 0
      %1710 = vmatpush1.bf16.msra.mxu0 %v1694
      %1711 = vmatprep.subr.bf16.mxu0 0
      %1712 = vmatpush1.bf16.msra.mxu0 %v1693
      %1713 = vmatprep.subr.bf16.mxu0 0
      %1714 = vmatpush1.bf16.msra.mxu0 %v1692
      %1715 = vmatprep.subr.bf16.mxu0 0
      %1716 = vmatpush1.bf16.msra.mxu0 %v1691
      %1717 = vmatprep.subr.bf16.mxu0 0
      %1718 = vmatpush1.bf16.msra.mxu0 %v1690
      %1719 = vmatprep.subr.bf16.mxu0 0
      %1720 = vmatpush1.bf16.msra.mxu0 %v1689
      %1721 = vmatprep.subr.bf16.mxu0 0
      %1722 = vmatpush2.bf16.msra.mxu0 0
      %1723 = vmatprep.subr.bf16.mxu0 0
      %1724 = vmatpush2.bf16.msra.mxu0 0
      %1725 = vmatprep.subr.bf16.mxu0 0
      %1726 = vmatpush2.bf16.msra.mxu0 0
      %1727 = vmatprep.subr.bf16.mxu0 0
      %1728 = vmatpush2.bf16.msra.mxu0 0
      %1729 = vmatprep.subr.bf16.mxu0 0
      %1730 = vmatpush2.bf16.msra.mxu0 0
      %1731 = vmatprep.subr.bf16.mxu0 0
      %1732 = vmatpush2.bf16.msra.mxu0 0
      %1733 = vmatprep.subr.bf16.mxu0 0
      %1734 = vmatpush2.bf16.msra.mxu0 0
      %1735 = vmatprep.subr.bf16.mxu0 0
      %1736 = vmatpush2.bf16.msra.mxu0 0
      %1737 = vmatprep.mubr.bf16.mxu0 0
      %1738 = vmatmul.mubr.bf16.gmra.mxu0 %v1490
      %v1739 = vpop.f32.mrf.mxu0
      %v1740 = vadd.f32 %v1643, %v1739
      %v1741 = vpop.f32.mrf.mxu0
      %v1742 = vpop.f32.mrf.mxu0
      %v1743 = vadd.f32 %v1646, %v1742
      %v1744 = vpop.f32.mrf.mxu0
      %1745 = vmatprep.mubr.bf16.mxu0 0
      %1746 = vmatmul.mubr.bf16.gmra.mxu0 %v1491
      %v1747 = vpop.f32.mrf.mxu0
      %v1748 = vadd.f32 %v1651, %v1747
      %v1749 = vpop.f32.mrf.mxu0
      %v1750 = vpop.f32.mrf.mxu0
      %v1751 = vadd.f32 %v1654, %v1750
      %v1752 = vpop.f32.mrf.mxu0
      %1753 = vdwg.mxu0
      %1754 = vst [vmem:[%s390] sm:$0xff] %v1740
      %1755 = vst [vmem:[%s390 + $0x8] sm:$0xff] %v1743
      %1756 = vst [vmem:[%s390 + $0x10] sm:$0xff] %v1748
      %1757 = vst [vmem:[%s390 + $0x18] sm:$0xff] %v1751
      %s1758 = smul.u32 4, %s25
      %p1759 = scmp.lt.s32.totalorder %s24, 1
      %s1760 = scalar_select %p1759, %s24, 1
      %p1761 = scmp.lt.s32.totalorder %s1758, 7
      %s1762 = scalar_select %p1761, %s1758, 7
      %s1763 = smul.addr %s1760, 8
      %s1764 = sadd.s32 %s1762, %s1763
      %s1765 = smul.addr %s1764, 8
      %s1766 = scalar_lea.vmem %s9, %s1765
      // Predicated region
      $region57: #{preact_bottleneck_forward.3} parent=55 // pred_check
        %p1767 = pneg %p253
      $region58: #{preact_bottleneck_forward.3} parent=55 // pred_check_branch
        %1769 = sbr.rel (%p1767) target = $region60
      $region59: #{preact_bottleneck_forward.3} parent=55 // pred_region
        %s1770 = smul.u32 4, %s25
      $region60: #{preact_bottleneck_forward.3} parent=55 // pred_fallthru
        _
    $region56: #{preact_bottleneck_forward.3} parent=5 // pred_fallthru
      _
    %p1771 = scmp.le.s32.totalorder 2, %s15
    // Predicated region
    $region61: #{preact_bottleneck_forward.3} parent=5 // pred_check
      %p1772 = pneg %p1771
    $region62: #{preact_bottleneck_forward.3} parent=5 // pred_check_branch
      %1774 = sbr.rel (%p1772) target = $region64
    $region63: #{preact_bottleneck_forward.3} parent=5 // pred_region
      %s1775 = ssub.s32 %s15, 2
      // Predicated region
      $region65: #{preact_bottleneck_forward.3} parent=63 // pred_check
        %p1776 = pneg %p259
      $region66: #{preact_bottleneck_forward.3} parent=63 // pred_check_branch
        %1778 = sbr.rel (%p1776) target = $region68
      $region67: #{preact_bottleneck_forward.3} parent=63 // pred_region
        %s1779 = smul.u32 4, %s27
        %p1780 = scmp.lt.s32.totalorder %s26, 1
        %s1781 = scalar_select %p1780, %s26, 1
        %p1782 = scmp.lt.s32.totalorder %s1779, 7
        %s1783 = scalar_select %p1782, %s1779, 7
        %s1784 = smul.addr %s1781, 8
        %s1785 = sadd.s32 %s1783, %s1784
        %s1786 = smul.addr %s1785, 8
        %s1787 = scalar_lea.vmem %s9, %s1786
      $region68: #{preact_bottleneck_forward.3} parent=63 // pred_fallthru
        _
    $region64: #{preact_bottleneck_forward.3} parent=5 // pred_fallthru
      _
  $region6: #{preact_bottleneck_forward.3} parent=0 // loop_footer
    %s19 = sadd.s32 1, %s15
  $region7: #{preact_bottleneck_forward.3} parent=0 // loop_footer_branch
    %14 = sbr.rel target = $region3
  $region8: #{preact_bottleneck_forward.3} parent=0 // loop_exit
    _

</llo_original>
